<compile_context>
chip_gen: v7x
topology: tpu7x:2x2x1
jax: 0.10.0
libtpu: 0.0.40
codegen_flags: <defaults>
</compile_context>

<pallas_src>
import jax
import jax.numpy as jnp
from jax.experimental import pallas as pl
from jax.experimental.pallas import tpu as pltpu

# weight slot order (matches the nn.Linear members of fixed_gru)
IU, HU, IR, HR, IH, HH = range(6)   # i2h_update, h2h_update, i2h_reset, h2h_reset, i2h, h2h


def _round_up(x, m):
    return (x + m - 1) // m * m


def _make_gru_kernel(T, B, E, BBP):
    BB = B * B
    E2 = 2 * E

    def kernel(txt_ref, wx_ref, bx_ref, bhh3_ref, whru_ref, whh_ref,
               out_ref, xpb_ref):
        # txt_ref : [T*BBP, E]  pre-broadcast, time-major trajectory rows
        # wx_ref  : [E, 3E]     [W_ir | W_iu | W_ih]            (reset first)
        # bx_ref  : [1, 3E]     [b_ir+b_hr | b_iu+b_hu | b_ih]  (no b_hh here)
        # bhh3_ref: [1, 3E]     [0 | 0 | b_hh]
        # whru_ref: [E, 2E]     [W_hr | W_hu]                   (reset first)
        # whh_ref : [E, E]      W_hh
        # xpb_ref : [(T-1)*BBP, 3E] VMEM scratch, staged x-terms for steps>=1

        # ---- Prologue: ONE MXU matmul for ALL input-side projections ----
        xp_all = (jnp.dot(txt_ref[...], wx_ref[...],
                          preferred_element_type=jnp.float32)
                  + bx_ref[...])                                  # [T*BBP, 3E]

        # step 0: rows of slab 0 are txt[a,0], so this is already the state
        # in trajectory-row layout: h0rows[a*B+b] = tanh(i2h(txt[a,0]) + b_ih)
        h0rows = jnp.tanh(xp_all[:BBP, E2:])                      # [BBP, E]

        # stage x-terms for steps 1..T-1, folding b_hh into the i2h slot here
        # (single aligned store; t=0 slab is never stored / read again)
        xpb_ref[...] = xp_all[BBP:] + bhh3_ref[...]               # [(T-1)*BBP, 3E]

        whru = whru_ref[...]                                      # [E, 2E]
        whh = whh_ref[...]                                        # [E, E]

        h = h0rows
        acc = jnp.zeros((BBP, E), jnp.float32)

        # ---- Fully unrolled recurrence: static, 8-sublane-aligned slices ----
        # TODO(synk): keep whru/whh MXU-resident across steps with
        # pltpu.matmul_push_rhs / matmul_acc_lhs / matmul_pop (and split across
        # mxu_index values on v5e) if the bundle dump shows per-step RHS pushes.
        for t in range(1, T):
            xp = xpb_ref[(t - 1) * BBP:t * BBP, :]                # [BBP, 3E]
            # fused hidden-side matmul; reset columns come first so the
            # dependent gate drains from the MXU result FIFO earliest
            hur = jnp.dot(h, whru, preferred_element_type=jnp.float32)
            rst = jax.nn.sigmoid(xp[:, :E] + hur[:, :E])          # critical path
            hh = jnp.dot(rst * h, whh, preferred_element_type=jnp.float32)
            upd = jax.nn.sigmoid(xp[:, E:E2] + hur[:, E:])        # hidden under W_hh matmul
            hc = jnp.tanh(xp[:, E2:] + hh)
            h = h + upd * (hc - h)                                # = upd*hc + (1-upd)*h
            acc = acc + h                                         # reduce later

        # ---- Epilogue: single cross-sublane reduction + mean normalisation ----
        sum_states = acc[:BB].reshape(B, B, E).sum(axis=1)        # [B, E]
        h0 = h0rows[:BB].reshape(B, B, E)[:, 0, :]                # [B, E]
        inv_denom = jnp.float32(1.0 / (1 + (T - 1) * B))          # len(cat(res,1))
        out_ref[...] = ((h0 + sum_states) * inv_denom).astype(out_ref.dtype)

    return kernel


@jax.jit
def fixed_gru_pallas(txt, W, b):
    """txt: [B, T, E] f32; W: [6, E, E] (transposed torch weights, y = x @ W[k] + b[k]);
    b: [6, 1, E].  Returns [B, E] f32, matching fixed_gru.forward."""
    B, T, E = txt.shape
    BB = B * B
    BBP = max(8, _round_up(BB, 8))
    pad = BBP - BB
    f32 = jnp.float32

    # --- weight / bias fusion (wrapper-side, done once by XLA) ---
    wx = jnp.concatenate([W[IR], W[IU], W[IH]], axis=1)                  # [E, 3E]
    bx = jnp.concatenate([b[IR] + b[HR], b[IU] + b[HU], b[IH]], axis=1)  # [1, 3E]
    bhh3 = jnp.concatenate([jnp.zeros((1, 2 * E), f32), b[HH]], axis=1)  # [1, 3E]
    whru = jnp.concatenate([W[HR], W[HU]], axis=1)                       # [E, 2E]
    whh = W[HH]                                                          # [E, E]

    # --- input broadcast done in the wrapper (layout plumbing, by XLA) ---
    # slab t, row a*B+b:
    #   t == 0 : txt[a, 0]   (step-0 states come out in trajectory-row layout)
    #   t >= 1 : txt[b, t]   (the PyTorch broadcasting semantics)
    txt_t = jnp.transpose(txt, (1, 0, 2)).astype(f32)                    # [T, B, E]
    slab0 = jnp.repeat(txt_t[0], B, axis=0)                              # [BB, E]
    rest = jnp.tile(txt_t[1:], (1, B, 1))                                # [T-1, BB, E]
    if pad:
        slab0 = jnp.concatenate([slab0, jnp.zeros((pad, E), f32)], axis=0)
        rest = jnp.concatenate([rest, jnp.zeros((T - 1, pad, E), f32)], axis=1)
    txt_rep = jnp.concatenate([slab0[None], rest], axis=0).reshape(T * BBP, E)

    kernel = _make_gru_kernel(T, B, E, BBP)
    # Gridless single invocation: every operand fits comfortably in VMEM.
    return pl.pallas_call(
        kernel,
        out_shape=jax.ShapeDtypeStruct((B, E), f32),
        scratch_shapes=[pltpu.VMEM(((T - 1) * BBP, 3 * E), f32)],
    )(txt_rep, wx, bx, bhh3, whru, whh)


def fixed_gru_ref(txt, W, b):
    """Pure-JAX replica of the PyTorch forward (including its broadcasting)."""
    W_iu, W_hu, W_ir, W_hr, W_ih, W_hh = (W[k] for k in range(6))
    b_iu, b_hu, b_ir, b_hr, b_ih, b_hh = (b[k] for k in range(6))
    T = txt.shape[1]
    res = []
    for i in range(T):
        if i == 0:
            out = jnp.tanh(txt[:, 0] @ W_ih + b_ih)[:, None, :]          # [B,1,E]
        else:
            prev = res[i - 1]
            upd = jax.nn.sigmoid((txt[:, i] @ W_iu + b_iu) + (prev @ W_hu + b_hu))
            rst = jax.nn.sigmoid((txt[:, i] @ W_ir + b_ir) + (prev @ W_hr + b_hr))
            hc = jnp.tanh((txt[:, i] @ W_ih + b_ih) + ((rst * prev) @ W_hh + b_hh))
            out = upd * hc + (1.0 - upd) * prev                          # [B,B,E]
        res.append(out)
    return jnp.mean(jnp.concatenate(res, axis=1), axis=1)


if __name__ == "__main__":
    B, T, E = 2, 8, 128       # batch, num_steps, emb_dim

    key = jax.random.PRNGKey(0)
    k_w, k_b, k_x = jax.random.split(key, 3)
    W = 0.1 * jax.random.normal(k_w, (6, E, E), jnp.float32)   # deterministic "weights"
    b = 0.1 * jax.random.normal(k_b, (6, 1, E), jnp.float32)   # deterministic "biases"
    txt = jax.random.normal(k_x, (B, T, E), jnp.float32)

    out = jax.block_until_ready(fixed_gru_pallas(txt, W, b))
    ref = fixed_gru_ref(txt, W, b)
    assert out.shape == (B, E) and out.dtype == jnp.float32
    assert jnp.allclose(out, ref, atol=1e-4, rtol=1e-4), (out, ref)
    print("KERNEL_OK")
</pallas_src>

<mosaic_0001>
module attributes {stable_mosaic.version = 11 : i64} {
  func.func @kernel(%arg0: memref<64x128xf32, #tpu.memory_space<vmem>>, %arg1: memref<128x384xf32, #tpu.memory_space<vmem>>, %arg2: memref<1x384xf32, #tpu.memory_space<vmem>>, %arg3: memref<1x384xf32, #tpu.memory_space<vmem>>, %arg4: memref<128x256xf32, #tpu.memory_space<vmem>>, %arg5: memref<128x128xf32, #tpu.memory_space<vmem>>, %arg6: memref<2x128xf32, #tpu.memory_space<vmem>>, %arg7: memref<56x384xf32, #tpu.memory_space<vmem>>) attributes {dimension_semantics = [], scalar_prefetch = 0 : i64, scratch_operands = 1 : i64, tpu.core_type = #tpu.core_type<tc>} {
    %c0 = arith.constant 0 : index
    %c0_0 = arith.constant 0 : index
    %0 = vector.load %arg0[%c0, %c0_0] : memref<64x128xf32, #tpu.memory_space<vmem>>, vector<64x128xf32>
    %c0_1 = arith.constant 0 : index
    %c0_2 = arith.constant 0 : index
    %1 = vector.load %arg1[%c0_1, %c0_2] : memref<128x384xf32, #tpu.memory_space<vmem>>, vector<128x384xf32>
    %cst = arith.constant dense<0.000000e+00> : vector<64x384xf32>
    %2 = tpu.matmul %0, %1, %cst {dimension_numbers = #tpu.dot_dimension_numbers<[1], [0], [0], [1], [0, 0, 1, 1], [], []>} : vector<64x128xf32>, vector<128x384xf32>, vector<64x384xf32> -> vector<64x384xf32>
    %c0_3 = arith.constant 0 : index
    %c0_4 = arith.constant 0 : index
    %3 = vector.load %arg2[%c0_3, %c0_4] : memref<1x384xf32, #tpu.memory_space<vmem>>, vector<1x384xf32>
    %4 = vector.broadcast %3 : vector<1x384xf32> to vector<64x384xf32>
    %5 = arith.addf %2, %4 : vector<64x384xf32>
    %6 = vector.extract_strided_slice %5 {offsets = [0, 256], sizes = [8, 128], strides = [1, 1]} : vector<64x384xf32> to vector<8x128xf32>
    %7 = math.tanh %6 : vector<8x128xf32>
    %8 = vector.extract_strided_slice %5 {offsets = [8, 0], sizes = [56, 384], strides = [1, 1]} : vector<64x384xf32> to vector<56x384xf32>
    %c0_5 = arith.constant 0 : index
    %c0_6 = arith.constant 0 : index
    %9 = vector.load %arg3[%c0_5, %c0_6] : memref<1x384xf32, #tpu.memory_space<vmem>>, vector<1x384xf32>
    %10 = vector.broadcast %9 : vector<1x384xf32> to vector<56x384xf32>
    %11 = arith.addf %8, %10 : vector<56x384xf32>
    %c0_7 = arith.constant 0 : index
    %c0_8 = arith.constant 0 : index
    %12 = vector.load %arg7[%c0_7, %c0_8] : memref<56x384xf32, #tpu.memory_space<vmem>>, vector<56x384xf32>
    tpu.vector_store %arg7[%c0_7, %c0_8], %11 {strides = array<i32>} : memref<56x384xf32, #tpu.memory_space<vmem>>, vector<56x384xf32>,
    %c0_9 = arith.constant 0 : index
    %c0_10 = arith.constant 0 : index
    %13 = vector.load %arg4[%c0_9, %c0_10] : memref<128x256xf32, #tpu.memory_space<vmem>>, vector<128x256xf32>
    %c0_11 = arith.constant 0 : index
    %c0_12 = arith.constant 0 : index
    %14 = vector.load %arg5[%c0_11, %c0_12] : memref<128x128xf32, #tpu.memory_space<vmem>>, vector<128x128xf32>
    %cst_13 = arith.constant 0.000000e+00 : f32
    %15 = vector.broadcast %cst_13 : f32 to vector<8x128xf32>
    %c0_14 = arith.constant 0 : index
    %c0_15 = arith.constant 0 : index
    %16 = vector.load %arg7[%c0_14, %c0_15] : memref<56x384xf32, #tpu.memory_space<vmem>>, vector<8x384xf32>
    %cst_16 = arith.constant dense<0.000000e+00> : vector<8x256xf32>
    %17 = tpu.matmul %7, %13, %cst_16 {dimension_numbers = #tpu.dot_dimension_numbers<[1], [0], [0], [1], [0, 0, 1, 1], [], []>} : vector<8x128xf32>, vector<128x256xf32>, vector<8x256xf32> -> vector<8x256xf32>
    %18 = vector.extract_strided_slice %16 {offsets = [0, 0], sizes = [8, 128], strides = [1, 1]} : vector<8x384xf32> to vector<8x128xf32>
    %19 = vector.extract_strided_slice %17 {offsets = [0, 0], sizes = [8, 128], strides = [1, 1]} : vector<8x256xf32> to vector<8x128xf32>
    %20 = arith.addf %18, %19 : vector<8x128xf32>
    %21 = arith.negf %20 : vector<8x128xf32>
    %22 = math.exp %21 : vector<8x128xf32>
    %cst_17 = arith.constant 1.000000e+00 : f32
    %23 = vector.broadcast %cst_17 : f32 to vector<8x128xf32>
    %24 = arith.addf %23, %22 : vector<8x128xf32>
    %25 = arith.divf %23, %24 : vector<8x128xf32>
    %26 = arith.mulf %25, %7 : vector<8x128xf32>
    %cst_18 = arith.constant dense<0.000000e+00> : vector<8x128xf32>
    %27 = tpu.matmul %26, %14, %cst_18 {dimension_numbers = #tpu.dot_dimension_numbers<[1], [0], [0], [1], [0, 0, 1, 1], [], []>} : vector<8x128xf32>, vector<128x128xf32>, vector<8x128xf32> -> vector<8x128xf32>
    %28 = vector.extract_strided_slice %16 {offsets = [0, 128], sizes = [8, 128], strides = [1, 1]} : vector<8x384xf32> to vector<8x128xf32>
    %29 = vector.extract_strided_slice %17 {offsets = [0, 128], sizes = [8, 128], strides = [1, 1]} : vector<8x256xf32> to vector<8x128xf32>
    %30 = arith.addf %28, %29 : vector<8x128xf32>
    %31 = arith.negf %30 : vector<8x128xf32>
    %32 = math.exp %31 : vector<8x128xf32>
    %cst_19 = arith.constant 1.000000e+00 : f32
    %33 = vector.broadcast %cst_19 : f32 to vector<8x128xf32>
    %34 = arith.addf %33, %32 : vector<8x128xf32>
    %35 = arith.divf %33, %34 : vector<8x128xf32>
    %36 = vector.extract_strided_slice %16 {offsets = [0, 256], sizes = [8, 128], strides = [1, 1]} : vector<8x384xf32> to vector<8x128xf32>
    %37 = arith.addf %36, %27 : vector<8x128xf32>
    %38 = math.tanh %37 : vector<8x128xf32>
    %39 = arith.subf %38, %7 : vector<8x128xf32>
    %40 = arith.mulf %35, %39 : vector<8x128xf32>
    %41 = arith.addf %7, %40 : vector<8x128xf32>
    %42 = arith.addf %15, %41 : vector<8x128xf32>
    %c8 = arith.constant 8 : index
    %c0_20 = arith.constant 0 : index
    %43 = vector.load %arg7[%c8, %c0_20] : memref<56x384xf32, #tpu.memory_space<vmem>>, vector<8x384xf32>
    %cst_21 = arith.constant dense<0.000000e+00> : vector<8x256xf32>
    %44 = tpu.matmul %41, %13, %cst_21 {dimension_numbers = #tpu.dot_dimension_numbers<[1], [0], [0], [1], [0, 0, 1, 1], [], []>} : vector<8x128xf32>, vector<128x256xf32>, vector<8x256xf32> -> vector<8x256xf32>
    %45 = vector.extract_strided_slice %43 {offsets = [0, 0], sizes = [8, 128], strides = [1, 1]} : vector<8x384xf32> to vector<8x128xf32>
    %46 = vector.extract_strided_slice %44 {offsets = [0, 0], sizes = [8, 128], strides = [1, 1]} : vector<8x256xf32> to vector<8x128xf32>
    %47 = arith.addf %45, %46 : vector<8x128xf32>
    %48 = arith.negf %47 : vector<8x128xf32>
    %49 = math.exp %48 : vector<8x128xf32>
    %cst_22 = arith.constant 1.000000e+00 : f32
    %50 = vector.broadcast %cst_22 : f32 to vector<8x128xf32>
    %51 = arith.addf %50, %49 : vector<8x128xf32>
    %52 = arith.divf %50, %51 : vector<8x128xf32>
    %53 = arith.mulf %52, %41 : vector<8x128xf32>
    %cst_23 = arith.constant dense<0.000000e+00> : vector<8x128xf32>
    %54 = tpu.matmul %53, %14, %cst_23 {dimension_numbers = #tpu.dot_dimension_numbers<[1], [0], [0], [1], [0, 0, 1, 1], [], []>} : vector<8x128xf32>, vector<128x128xf32>, vector<8x128xf32> -> vector<8x128xf32>
    %55 = vector.extract_strided_slice %43 {offsets = [0, 128], sizes = [8, 128], strides = [1, 1]} : vector<8x384xf32> to vector<8x128xf32>
    %56 = vector.extract_strided_slice %44 {offsets = [0, 128], sizes = [8, 128], strides = [1, 1]} : vector<8x256xf32> to vector<8x128xf32>
    %57 = arith.addf %55, %56 : vector<8x128xf32>
    %58 = arith.negf %57 : vector<8x128xf32>
    %59 = math.exp %58 : vector<8x128xf32>
    %cst_24 = arith.constant 1.000000e+00 : f32
    %60 = vector.broadcast %cst_24 : f32 to vector<8x128xf32>
    %61 = arith.addf %60, %59 : vector<8x128xf32>
    %62 = arith.divf %60, %61 : vector<8x128xf32>
    %63 = vector.extract_strided_slice %43 {offsets = [0, 256], sizes = [8, 128], strides = [1, 1]} : vector<8x384xf32> to vector<8x128xf32>
    %64 = arith.addf %63, %54 : vector<8x128xf32>
    %65 = math.tanh %64 : vector<8x128xf32>
    %66 = arith.subf %65, %41 : vector<8x128xf32>
    %67 = arith.mulf %62, %66 : vector<8x128xf32>
    %68 = arith.addf %41, %67 : vector<8x128xf32>
    %69 = arith.addf %42, %68 : vector<8x128xf32>
    %c16 = arith.constant 16 : index
    %c0_25 = arith.constant 0 : index
    %70 = vector.load %arg7[%c16, %c0_25] : memref<56x384xf32, #tpu.memory_space<vmem>>, vector<8x384xf32>
    %cst_26 = arith.constant dense<0.000000e+00> : vector<8x256xf32>
    %71 = tpu.matmul %68, %13, %cst_26 {dimension_numbers = #tpu.dot_dimension_numbers<[1], [0], [0], [1], [0, 0, 1, 1], [], []>} : vector<8x128xf32>, vector<128x256xf32>, vector<8x256xf32> -> vector<8x256xf32>
    %72 = vector.extract_strided_slice %70 {offsets = [0, 0], sizes = [8, 128], strides = [1, 1]} : vector<8x384xf32> to vector<8x128xf32>
    %73 = vector.extract_strided_slice %71 {offsets = [0, 0], sizes = [8, 128], strides = [1, 1]} : vector<8x256xf32> to vector<8x128xf32>
    %74 = arith.addf %72, %73 : vector<8x128xf32>
    %75 = arith.negf %74 : vector<8x128xf32>
    %76 = math.exp %75 : vector<8x128xf32>
    %cst_27 = arith.constant 1.000000e+00 : f32
    %77 = vector.broadcast %cst_27 : f32 to vector<8x128xf32>
    %78 = arith.addf %77, %76 : vector<8x128xf32>
    %79 = arith.divf %77, %78 : vector<8x128xf32>
    %80 = arith.mulf %79, %68 : vector<8x128xf32>
    %cst_28 = arith.constant dense<0.000000e+00> : vector<8x128xf32>
    %81 = tpu.matmul %80, %14, %cst_28 {dimension_numbers = #tpu.dot_dimension_numbers<[1], [0], [0], [1], [0, 0, 1, 1], [], []>} : vector<8x128xf32>, vector<128x128xf32>, vector<8x128xf32> -> vector<8x128xf32>
    %82 = vector.extract_strided_slice %70 {offsets = [0, 128], sizes = [8, 128], strides = [1, 1]} : vector<8x384xf32> to vector<8x128xf32>
    %83 = vector.extract_strided_slice %71 {offsets = [0, 128], sizes = [8, 128], strides = [1, 1]} : vector<8x256xf32> to vector<8x128xf32>
    %84 = arith.addf %82, %83 : vector<8x128xf32>
    %85 = arith.negf %84 : vector<8x128xf32>
    %86 = math.exp %85 : vector<8x128xf32>
    %cst_29 = arith.constant 1.000000e+00 : f32
    %87 = vector.broadcast %cst_29 : f32 to vector<8x128xf32>
    %88 = arith.addf %87, %86 : vector<8x128xf32>
    %89 = arith.divf %87, %88 : vector<8x128xf32>
    %90 = vector.extract_strided_slice %70 {offsets = [0, 256], sizes = [8, 128], strides = [1, 1]} : vector<8x384xf32> to vector<8x128xf32>
    %91 = arith.addf %90, %81 : vector<8x128xf32>
    %92 = math.tanh %91 : vector<8x128xf32>
    %93 = arith.subf %92, %68 : vector<8x128xf32>
    %94 = arith.mulf %89, %93 : vector<8x128xf32>
    %95 = arith.addf %68, %94 : vector<8x128xf32>
    %96 = arith.addf %69, %95 : vector<8x128xf32>
    %c24 = arith.constant 24 : index
    %c0_30 = arith.constant 0 : index
    %97 = vector.load %arg7[%c24, %c0_30] : memref<56x384xf32, #tpu.memory_space<vmem>>, vector<8x384xf32>
    %cst_31 = arith.constant dense<0.000000e+00> : vector<8x256xf32>
    %98 = tpu.matmul %95, %13, %cst_31 {dimension_numbers = #tpu.dot_dimension_numbers<[1], [0], [0], [1], [0, 0, 1, 1], [], []>} : vector<8x128xf32>, vector<128x256xf32>, vector<8x256xf32> -> vector<8x256xf32>
    %99 = vector.extract_strided_slice %97 {offsets = [0, 0], sizes = [8, 128], strides = [1, 1]} : vector<8x384xf32> to vector<8x128xf32>
    %100 = vector.extract_strided_slice %98 {offsets = [0, 0], sizes = [8, 128], strides = [1, 1]} : vector<8x256xf32> to vector<8x128xf32>
    %101 = arith.addf %99, %100 : vector<8x128xf32>
    %102 = arith.negf %101 : vector<8x128xf32>
    %103 = math.exp %102 : vector<8x128xf32>
    %cst_32 = arith.constant 1.000000e+00 : f32
    %104 = vector.broadcast %cst_32 : f32 to vector<8x128xf32>
    %105 = arith.addf %104, %103 : vector<8x128xf32>
    %106 = arith.divf %104, %105 : vector<8x128xf32>
    %107 = arith.mulf %106, %95 : vector<8x128xf32>
    %cst_33 = arith.constant dense<0.000000e+00> : vector<8x128xf32>
    %108 = tpu.matmul %107, %14, %cst_33 {dimension_numbers = #tpu.dot_dimension_numbers<[1], [0], [0], [1], [0, 0, 1, 1], [], []>} : vector<8x128xf32>, vector<128x128xf32>, vector<8x128xf32> -> vector<8x128xf32>
    %109 = vector.extract_strided_slice %97 {offsets = [0, 128], sizes = [8, 128], strides = [1, 1]} : vector<8x384xf32> to vector<8x128xf32>
    %110 = vector.extract_strided_slice %98 {offsets = [0, 128], sizes = [8, 128], strides = [1, 1]} : vector<8x256xf32> to vector<8x128xf32>
    %111 = arith.addf %109, %110 : vector<8x128xf32>
    %112 = arith.negf %111 : vector<8x128xf32>
    %113 = math.exp %112 : vector<8x128xf32>
    %cst_34 = arith.constant 1.000000e+00 : f32
    %114 = vector.broadcast %cst_34 : f32 to vector<8x128xf32>
    %115 = arith.addf %114, %113 : vector<8x128xf32>
    %116 = arith.divf %114, %115 : vector<8x128xf32>
    %117 = vector.extract_strided_slice %97 {offsets = [0, 256], sizes = [8, 128], strides = [1, 1]} : vector<8x384xf32> to vector<8x128xf32>
    %118 = arith.addf %117, %108 : vector<8x128xf32>
    %119 = math.tanh %118 : vector<8x128xf32>
    %120 = arith.subf %119, %95 : vector<8x128xf32>
    %121 = arith.mulf %116, %120 : vector<8x128xf32>
    %122 = arith.addf %95, %121 : vector<8x128xf32>
    %123 = arith.addf %96, %122 : vector<8x128xf32>
    %c32 = arith.constant 32 : index
    %c0_35 = arith.constant 0 : index
    %124 = vector.load %arg7[%c32, %c0_35] : memref<56x384xf32, #tpu.memory_space<vmem>>, vector<8x384xf32>
    %cst_36 = arith.constant dense<0.000000e+00> : vector<8x256xf32>
    %125 = tpu.matmul %122, %13, %cst_36 {dimension_numbers = #tpu.dot_dimension_numbers<[1], [0], [0], [1], [0, 0, 1, 1], [], []>} : vector<8x128xf32>, vector<128x256xf32>, vector<8x256xf32> -> vector<8x256xf32>
    %126 = vector.extract_strided_slice %124 {offsets = [0, 0], sizes = [8, 128], strides = [1, 1]} : vector<8x384xf32> to vector<8x128xf32>
    %127 = vector.extract_strided_slice %125 {offsets = [0, 0], sizes = [8, 128], strides = [1, 1]} : vector<8x256xf32> to vector<8x128xf32>
    %128 = arith.addf %126, %127 : vector<8x128xf32>
    %129 = arith.negf %128 : vector<8x128xf32>
    %130 = math.exp %129 : vector<8x128xf32>
    %cst_37 = arith.constant 1.000000e+00 : f32
    %131 = vector.broadcast %cst_37 : f32 to vector<8x128xf32>
    %132 = arith.addf %131, %130 : vector<8x128xf32>
    %133 = arith.divf %131, %132 : vector<8x128xf32>
    %134 = arith.mulf %133, %122 : vector<8x128xf32>
    %cst_38 = arith.constant dense<0.000000e+00> : vector<8x128xf32>
    %135 = tpu.matmul %134, %14, %cst_38 {dimension_numbers = #tpu.dot_dimension_numbers<[1], [0], [0], [1], [0, 0, 1, 1], [], []>} : vector<8x128xf32>, vector<128x128xf32>, vector<8x128xf32> -> vector<8x128xf32>
    %136 = vector.extract_strided_slice %124 {offsets = [0, 128], sizes = [8, 128], strides = [1, 1]} : vector<8x384xf32> to vector<8x128xf32>
    %137 = vector.extract_strided_slice %125 {offsets = [0, 128], sizes = [8, 128], strides = [1, 1]} : vector<8x256xf32> to vector<8x128xf32>
    %138 = arith.addf %136, %137 : vector<8x128xf32>
    %139 = arith.negf %138 : vector<8x128xf32>
    %140 = math.exp %139 : vector<8x128xf32>
    %cst_39 = arith.constant 1.000000e+00 : f32
    %141 = vector.broadcast %cst_39 : f32 to vector<8x128xf32>
    %142 = arith.addf %141, %140 : vector<8x128xf32>
    %143 = arith.divf %141, %142 : vector<8x128xf32>
    %144 = vector.extract_strided_slice %124 {offsets = [0, 256], sizes = [8, 128], strides = [1, 1]} : vector<8x384xf32> to vector<8x128xf32>
    %145 = arith.addf %144, %135 : vector<8x128xf32>
    %146 = math.tanh %145 : vector<8x128xf32>
    %147 = arith.subf %146, %122 : vector<8x128xf32>
    %148 = arith.mulf %143, %147 : vector<8x128xf32>
    %149 = arith.addf %122, %148 : vector<8x128xf32>
    %150 = arith.addf %123, %149 : vector<8x128xf32>
    %c40 = arith.constant 40 : index
    %c0_40 = arith.constant 0 : index
    %151 = vector.load %arg7[%c40, %c0_40] : memref<56x384xf32, #tpu.memory_space<vmem>>, vector<8x384xf32>
    %cst_41 = arith.constant dense<0.000000e+00> : vector<8x256xf32>
    %152 = tpu.matmul %149, %13, %cst_41 {dimension_numbers = #tpu.dot_dimension_numbers<[1], [0], [0], [1], [0, 0, 1, 1], [], []>} : vector<8x128xf32>, vector<128x256xf32>, vector<8x256xf32> -> vector<8x256xf32>
    %153 = vector.extract_strided_slice %151 {offsets = [0, 0], sizes = [8, 128], strides = [1, 1]} : vector<8x384xf32> to vector<8x128xf32>
    %154 = vector.extract_strided_slice %152 {offsets = [0, 0], sizes = [8, 128], strides = [1, 1]} : vector<8x256xf32> to vector<8x128xf32>
    %155 = arith.addf %153, %154 : vector<8x128xf32>
    %156 = arith.negf %155 : vector<8x128xf32>
    %157 = math.exp %156 : vector<8x128xf32>
    %cst_42 = arith.constant 1.000000e+00 : f32
    %158 = vector.broadcast %cst_42 : f32 to vector<8x128xf32>
    %159 = arith.addf %158, %157 : vector<8x128xf32>
    %160 = arith.divf %158, %159 : vector<8x128xf32>
    %161 = arith.mulf %160, %149 : vector<8x128xf32>
    %cst_43 = arith.constant dense<0.000000e+00> : vector<8x128xf32>
    %162 = tpu.matmul %161, %14, %cst_43 {dimension_numbers = #tpu.dot_dimension_numbers<[1], [0], [0], [1], [0, 0, 1, 1], [], []>} : vector<8x128xf32>, vector<128x128xf32>, vector<8x128xf32> -> vector<8x128xf32>
    %163 = vector.extract_strided_slice %151 {offsets = [0, 128], sizes = [8, 128], strides = [1, 1]} : vector<8x384xf32> to vector<8x128xf32>
    %164 = vector.extract_strided_slice %152 {offsets = [0, 128], sizes = [8, 128], strides = [1, 1]} : vector<8x256xf32> to vector<8x128xf32>
    %165 = arith.addf %163, %164 : vector<8x128xf32>
    %166 = arith.negf %165 : vector<8x128xf32>
    %167 = math.exp %166 : vector<8x128xf32>
    %cst_44 = arith.constant 1.000000e+00 : f32
    %168 = vector.broadcast %cst_44 : f32 to vector<8x128xf32>
    %169 = arith.addf %168, %167 : vector<8x128xf32>
    %170 = arith.divf %168, %169 : vector<8x128xf32>
    %171 = vector.extract_strided_slice %151 {offsets = [0, 256], sizes = [8, 128], strides = [1, 1]} : vector<8x384xf32> to vector<8x128xf32>
    %172 = arith.addf %171, %162 : vector<8x128xf32>
    %173 = math.tanh %172 : vector<8x128xf32>
    %174 = arith.subf %173, %149 : vector<8x128xf32>
    %175 = arith.mulf %170, %174 : vector<8x128xf32>
    %176 = arith.addf %149, %175 : vector<8x128xf32>
    %177 = arith.addf %150, %176 : vector<8x128xf32>
    %c48 = arith.constant 48 : index
    %c0_45 = arith.constant 0 : index
    %178 = vector.load %arg7[%c48, %c0_45] : memref<56x384xf32, #tpu.memory_space<vmem>>, vector<8x384xf32>
    %cst_46 = arith.constant dense<0.000000e+00> : vector<8x256xf32>
    %179 = tpu.matmul %176, %13, %cst_46 {dimension_numbers = #tpu.dot_dimension_numbers<[1], [0], [0], [1], [0, 0, 1, 1], [], []>} : vector<8x128xf32>, vector<128x256xf32>, vector<8x256xf32> -> vector<8x256xf32>
    %180 = vector.extract_strided_slice %178 {offsets = [0, 0], sizes = [8, 128], strides = [1, 1]} : vector<8x384xf32> to vector<8x128xf32>
    %181 = vector.extract_strided_slice %179 {offsets = [0, 0], sizes = [8, 128], strides = [1, 1]} : vector<8x256xf32> to vector<8x128xf32>
    %182 = arith.addf %180, %181 : vector<8x128xf32>
    %183 = arith.negf %182 : vector<8x128xf32>
    %184 = math.exp %183 : vector<8x128xf32>
    %cst_47 = arith.constant 1.000000e+00 : f32
    %185 = vector.broadcast %cst_47 : f32 to vector<8x128xf32>
    %186 = arith.addf %185, %184 : vector<8x128xf32>
    %187 = arith.divf %185, %186 : vector<8x128xf32>
    %188 = arith.mulf %187, %176 : vector<8x128xf32>
    %cst_48 = arith.constant dense<0.000000e+00> : vector<8x128xf32>
    %189 = tpu.matmul %188, %14, %cst_48 {dimension_numbers = #tpu.dot_dimension_numbers<[1], [0], [0], [1], [0, 0, 1, 1], [], []>} : vector<8x128xf32>, vector<128x128xf32>, vector<8x128xf32> -> vector<8x128xf32>
    %190 = vector.extract_strided_slice %178 {offsets = [0, 128], sizes = [8, 128], strides = [1, 1]} : vector<8x384xf32> to vector<8x128xf32>
    %191 = vector.extract_strided_slice %179 {offsets = [0, 128], sizes = [8, 128], strides = [1, 1]} : vector<8x256xf32> to vector<8x128xf32>
    %192 = arith.addf %190, %191 : vector<8x128xf32>
    %193 = arith.negf %192 : vector<8x128xf32>
    %194 = math.exp %193 : vector<8x128xf32>
    %cst_49 = arith.constant 1.000000e+00 : f32
    %195 = vector.broadcast %cst_49 : f32 to vector<8x128xf32>
    %196 = arith.addf %195, %194 : vector<8x128xf32>
    %197 = arith.divf %195, %196 : vector<8x128xf32>
    %198 = vector.extract_strided_slice %178 {offsets = [0, 256], sizes = [8, 128], strides = [1, 1]} : vector<8x384xf32> to vector<8x128xf32>
    %199 = arith.addf %198, %189 : vector<8x128xf32>
    %200 = math.tanh %199 : vector<8x128xf32>
    %201 = arith.subf %200, %176 : vector<8x128xf32>
    %202 = arith.mulf %197, %201 : vector<8x128xf32>
    %203 = arith.addf %176, %202 : vector<8x128xf32>
    %204 = arith.addf %177, %203 : vector<8x128xf32>
    %205 = vector.extract_strided_slice %204 {offsets = [0, 0], sizes = [4, 128], strides = [1, 1]} : vector<8x128xf32> to vector<4x128xf32>
    %206 = vector.shape_cast %205 : vector<4x128xf32> to vector<2x2x128xf32>
    %cst_50 = arith.constant dense<0.000000e+00> : vector<2x128xf32>
    %207 = vector.multi_reduction <add>, %206, %cst_50 [1] : vector<2x2x128xf32> to vector<2x128xf32>
    %208 = vector.extract_strided_slice %7 {offsets = [0, 0], sizes = [4, 128], strides = [1, 1]} : vector<8x128xf32> to vector<4x128xf32>
    %209 = vector.shape_cast %208 : vector<4x128xf32> to vector<2x2x128xf32>
    %210 = vector.extract_strided_slice %209 {offsets = [0, 0, 0], sizes = [2, 1, 128], strides = [1, 1, 1]} : vector<2x2x128xf32> to vector<2x1x128xf32>
    %211 = vector.shape_cast %210 : vector<2x1x128xf32> to vector<2x128xf32>
    %212 = arith.addf %211, %207 : vector<2x128xf32>
    %cst_51 = arith.constant 0.0666666701 : f32
    %213 = vector.broadcast %cst_51 : f32 to vector<2x128xf32>
    %214 = arith.mulf %212, %213 : vector<2x128xf32>
    %c0_52 = arith.constant 0 : index
    %c0_53 = arith.constant 0 : index
    %215 = vector.load %arg6[%c0_52, %c0_53] : memref<2x128xf32, #tpu.memory_space<vmem>>, vector<2x128xf32>
    tpu.vector_store %arg6[%c0_52, %c0_53], %214 {strides = array<i32>} : memref<2x128xf32, #tpu.memory_space<vmem>>, vector<2x128xf32>,
    return
  }
}

</mosaic_0001>

<llo_original>
// kernel: fixed_gru_pallas.1
$region0: #{fixed_gru_pallas.1}
  #allocation0 [shape = 'u32[]', space=smem, size = 0x4, offset = 0x4, fixed_abs, tag = 'smem constant byte address 0x4 - core index']
  #allocation1 [shape = 'u32[144,128]{1,0:T(1,128)}', space=vmem, size = 0x12000, scoped, tag = 'internal scratch']
  #allocation2 [shape = 'f32[56,384]{1,0:T(8,128)}', space=vmem, size = 0x15000, scoped, tag = 'scratch operand']
  %s0 = inlined_call_operand.vmem [shape: f32[64,128], index: 0, kind: input, shape index: {}]
  %s1 = inlined_call_operand.vmem [shape: f32[128,384], index: 1, kind: input, shape index: {}]
  %s2 = inlined_call_operand.vmem [shape: f32[1,384], index: 2, kind: input, shape index: {}]
  %s3 = inlined_call_operand.vmem [shape: f32[1,384], index: 3, kind: input, shape index: {}]
  %s4 = inlined_call_operand.vmem [shape: f32[128,256], index: 4, kind: input, shape index: {}]
  %s5 = inlined_call_operand.vmem [shape: f32[128,128], index: 5, kind: input, shape index: {}]
  %s6 = inlined_call_operand.hbm [shape: f32[2,128], index: 6, kind: output, shape index: {}]
  %s7 = sld [smem:[#allocation0]]
  $region34: #{fixed_gru_pallas.1} parent=0
    _
  %s9 = ssub.s32 1, %s7
  %s10 = scalar_select 0, %s9, %s7
  $region1: #{fixed_gru_pallas.1} parent=0
    #allocation3 [shape = 'u8[1024]{0}', space=vmem, size = 0x400, scoped, tag = 'output window, operand 0, single buffered']
    #allocation4 [shape = 's32[1]{0}', space=sflag, size = 0x4, scoped, tag = 'scoped memory for fixed_gru_pallas.1']
    %11 = vsyncpa [#allocation4], 0
    // Predicated region
    $region2: #{fixed_gru_pallas.1} parent=1 // pred_check
      _
    $region3: #{fixed_gru_pallas.1} parent=1 // pred_check_branch
      %13 = sbr.rel (0) target = $region5
    $region4: #{fixed_gru_pallas.1} parent=1 // pred_region
      _
    $region5: #{fixed_gru_pallas.1} parent=1 // pred_fallthru
      _
    // Predicated region
    $region6: #{fixed_gru_pallas.1} parent=1 // pred_check
      _
    $region7: #{fixed_gru_pallas.1} parent=1 // pred_check_branch
      %15 = sbr.rel (0) target = $region9
    $region8: #{fixed_gru_pallas.1} parent=1 // pred_region
      _
    $region9: #{fixed_gru_pallas.1} parent=1 // pred_fallthru
      _
    // Predicated region
    $region10: #{fixed_gru_pallas.1} parent=1 // pred_check
      _
    $region11: #{fixed_gru_pallas.1} parent=1 // pred_check_branch
      %17 = sbr.rel (0) target = $region13
    $region12: #{fixed_gru_pallas.1} parent=1 // pred_region
      _
    $region13: #{fixed_gru_pallas.1} parent=1 // pred_fallthru
      _
    // Predicated region
    $region14: #{fixed_gru_pallas.1} parent=1 // pred_check
      _
    $region15: #{fixed_gru_pallas.1} parent=1 // pred_check_branch
      %19 = sbr.rel (0) target = $region17
    $region16: #{fixed_gru_pallas.1} parent=1 // pred_region
      _
    $region17: #{fixed_gru_pallas.1} parent=1 // pred_fallthru
      _
    // Predicated region
    $region18: #{fixed_gru_pallas.1} parent=1 // pred_check
      _
    $region19: #{fixed_gru_pallas.1} parent=1 // pred_check_branch
      %21 = sbr.rel (0) target = $region21
    $region20: #{fixed_gru_pallas.1} parent=1 // pred_region
      _
    $region21: #{fixed_gru_pallas.1} parent=1 // pred_fallthru
      _
    // Predicated region
    $region22: #{fixed_gru_pallas.1} parent=1 // pred_check
      _
    $region23: #{fixed_gru_pallas.1} parent=1 // pred_check_branch
      %23 = sbr.rel (0) target = $region25
    $region24: #{fixed_gru_pallas.1} parent=1 // pred_region
      _
    $region25: #{fixed_gru_pallas.1} parent=1 // pred_fallthru
      _
    %v24 = vld [vmem:[%s0] sm:$0xff]
    %v25 = vld [vmem:[%s0 + $0x8] sm:$0xff]
    %v26 = vld [vmem:[%s0 + $0x10] sm:$0xff]
    %v27 = vld [vmem:[%s0 + $0x18] sm:$0xff]
    %v28 = vld [vmem:[%s0 + $0x20] sm:$0xff]
    %v29 = vld [vmem:[%s0 + $0x28] sm:$0xff]
    %v30 = vld [vmem:[%s0 + $0x30] sm:$0xff]
    %v31 = vld [vmem:[%s0 + $0x38] sm:$0xff]
    %v32 = vld [vmem:[%s1] sm:$0xff]
    %v33 = vld [vmem:[%s1 + $0x8] sm:$0xff]
    %v34 = vld [vmem:[%s1 + $0x10] sm:$0xff]
    %v35 = vld [vmem:[%s1 + $0x18] sm:$0xff]
    %v36 = vld [vmem:[%s1 + $0x20] sm:$0xff]
    %v37 = vld [vmem:[%s1 + $0x28] sm:$0xff]
    %v38 = vld [vmem:[%s1 + $0x30] sm:$0xff]
    %v39 = vld [vmem:[%s1 + $0x38] sm:$0xff]
    %v40 = vld [vmem:[%s1 + $0x40] sm:$0xff]
    %v41 = vld [vmem:[%s1 + $0x48] sm:$0xff]
    %v42 = vld [vmem:[%s1 + $0x50] sm:$0xff]
    %v43 = vld [vmem:[%s1 + $0x58] sm:$0xff]
    %v44 = vld [vmem:[%s1 + $0x60] sm:$0xff]
    %v45 = vld [vmem:[%s1 + $0x68] sm:$0xff]
    %v46 = vld [vmem:[%s1 + $0x70] sm:$0xff]
    %v47 = vld [vmem:[%s1 + $0x78] sm:$0xff]
    %v48 = vld [vmem:[%s1 + $0x80] sm:$0xff]
    %v49 = vld [vmem:[%s1 + $0x88] sm:$0xff]
    %v50 = vld [vmem:[%s1 + $0x90] sm:$0xff]
    %v51 = vld [vmem:[%s1 + $0x98] sm:$0xff]
    %v52 = vld [vmem:[%s1 + $0xa0] sm:$0xff]
    %v53 = vld [vmem:[%s1 + $0xa8] sm:$0xff]
    %v54 = vld [vmem:[%s1 + $0xb0] sm:$0xff]
    %v55 = vld [vmem:[%s1 + $0xb8] sm:$0xff]
    %v56 = vld [vmem:[%s1 + $0xc0] sm:$0xff]
    %v57 = vld [vmem:[%s1 + $0xc8] sm:$0xff]
    %v58 = vld [vmem:[%s1 + $0xd0] sm:$0xff]
    %v59 = vld [vmem:[%s1 + $0xd8] sm:$0xff]
    %v60 = vld [vmem:[%s1 + $0xe0] sm:$0xff]
    %v61 = vld [vmem:[%s1 + $0xe8] sm:$0xff]
    %v62 = vld [vmem:[%s1 + $0xf0] sm:$0xff]
    %v63 = vld [vmem:[%s1 + $0xf8] sm:$0xff]
    %v64 = vld [vmem:[%s1 + $0x100] sm:$0xff]
    %v65 = vld [vmem:[%s1 + $0x108] sm:$0xff]
    %v66 = vld [vmem:[%s1 + $0x110] sm:$0xff]
    %v67 = vld [vmem:[%s1 + $0x118] sm:$0xff]
    %v68 = vld [vmem:[%s1 + $0x120] sm:$0xff]
    %v69 = vld [vmem:[%s1 + $0x128] sm:$0xff]
    %v70 = vld [vmem:[%s1 + $0x130] sm:$0xff]
    %v71 = vld [vmem:[%s1 + $0x138] sm:$0xff]
    %v72 = vld [vmem:[%s1 + $0x140] sm:$0xff]
    %v73 = vld [vmem:[%s1 + $0x148] sm:$0xff]
    %v74 = vld [vmem:[%s1 + $0x150] sm:$0xff]
    %v75 = vld [vmem:[%s1 + $0x158] sm:$0xff]
    %v76 = vld [vmem:[%s1 + $0x160] sm:$0xff]
    %v77 = vld [vmem:[%s1 + $0x168] sm:$0xff]
    %v78 = vld [vmem:[%s1 + $0x170] sm:$0xff]
    %v79 = vld [vmem:[%s1 + $0x178] sm:$0xff]
    %v80 = vld [vmem:[%s2] sm:$0x7]
    %v82 = vlaneseq
    %v83 = vshrl.u32 %v82, 7
    %v84 = vsub.s32 0, %v83
    %v85 = vrot.slane %v80, %v84
    %v86 = vlaneseq
    %v87 = vshrl.u32 %v86, 7
    %v88 = vsub.s32 1, %v87
    %v89 = vrot.slane %v80, %v88
    %v90 = vlaneseq
    %v91 = vshrl.u32 %v90, 7
    %v92 = vsub.s32 2, %v91
    %v93 = vrot.slane %v80, %v92
    %97 = vmatprep.subr.mxu0 %v33
    %98 = vmatpush1.msra.mxu0 %v32
    %99 = vmatprep.subr.mxu0 %v36
    %100 = vmatpush1.msra.mxu0 %v35
    %101 = vmatprep.subr.mxu0 %v39
    %102 = vmatpush1.msra.mxu0 %v38
    %103 = vmatprep.subr.mxu0 %v42
    %104 = vmatpush1.msra.mxu0 %v41
    %105 = vmatprep.subr.mxu0 %v45
    %106 = vmatpush1.msra.mxu0 %v44
    %107 = vmatprep.subr.mxu0 %v48
    %108 = vmatpush1.msra.mxu0 %v47
    %109 = vmatprep.subr.mxu0 %v51
    %110 = vmatpush1.msra.mxu0 %v50
    %111 = vmatprep.subr.mxu0 %v54
    %112 = vmatpush1.msra.mxu0 %v53
    %113 = vmatprep.subr.mxu0 %v57
    %114 = vmatpush1.msra.mxu0 %v56
    %115 = vmatprep.subr.mxu0 %v60
    %116 = vmatpush1.msra.mxu0 %v59
    %117 = vmatprep.subr.mxu0 %v63
    %118 = vmatpush1.msra.mxu0 %v62
    %119 = vmatprep.subr.mxu0 %v66
    %120 = vmatpush1.msra.mxu0 %v65
    %121 = vmatprep.subr.mxu0 %v69
    %122 = vmatpush1.msra.mxu0 %v68
    %123 = vmatprep.subr.mxu0 %v72
    %124 = vmatpush1.msra.mxu0 %v71
    %125 = vmatprep.subr.mxu0 %v75
    %126 = vmatpush1.msra.mxu0 %v74
    %127 = vmatprep.subr.mxu0 %v78
    %128 = vmatpush1.msra.mxu0 %v77
    %129 = vmatprep.subr.mxu0 0.0
    %130 = vmatpush1.msra.mxu0 0.0
    %131 = vmatprep.subr.mxu0 0.0
    %132 = vmatpush1.msra.mxu0 0.0
    %133 = vmatprep.subr.mxu0 0.0
    %134 = vmatpush1.msra.mxu0 0.0
    %135 = vmatprep.subr.mxu0 0.0
    %136 = vmatpush1.msra.mxu0 0.0
    %137 = vmatprep.subr.mxu0 0.0
    %138 = vmatpush1.msra.mxu0 0.0
    %139 = vmatprep.subr.mxu0 0.0
    %140 = vmatpush1.msra.mxu0 0.0
    %141 = vmatprep.subr.mxu0 0.0
    %142 = vmatpush1.msra.mxu0 0.0
    %143 = vmatprep.subr.mxu0 0.0
    %144 = vmatpush1.msra.mxu0 0.0
    %145 = vmatprep.subr.mxu0 0.0
    %146 = vmatpush1.msra.mxu0 0.0
    %147 = vmatprep.subr.mxu0 0.0
    %148 = vmatpush1.msra.mxu0 0.0
    %149 = vmatprep.subr.mxu0 0.0
    %150 = vmatpush1.msra.mxu0 0.0
    %151 = vmatprep.subr.mxu0 0.0
    %152 = vmatpush1.msra.mxu0 0.0
    %153 = vmatprep.subr.mxu0 0.0
    %154 = vmatpush1.msra.mxu0 0.0
    %155 = vmatprep.subr.mxu0 0.0
    %156 = vmatpush1.msra.mxu0 0.0
    %157 = vmatprep.subr.mxu0 0.0
    %158 = vmatpush1.msra.mxu0 0.0
    %159 = vmatprep.subr.mxu0 0.0
    %160 = vmatpush1.msra.mxu0 0.0
    %161 = vmatprep.mubr.f32.mxu0 0.0
    %162 = vmatmul.mubr.f32.gmra.mrb[0].mxu0 %v24
    %v163 = vpop.f32.mrb[0].mxu0
    %v164 = vpop.f32.mrb[0].mxu0
    %165 = vmatprep.mubr.f32.mxu0 0.0
    %166 = vmatmul.mubr.f32.gmra.mrb[0].mxu0 %v25
    %v167 = vpop.f32.mrb[0].mxu0
    %v168 = vadd.f32 %v85, %v167
    %v169 = vpop.f32.mrb[0].mxu0
    %v170 = vadd.f32 %v89, %v169
    %171 = vmatprep.mubr.f32.mxu0 0.0
    %172 = vmatmul.mubr.f32.gmra.mrb[0].mxu0 %v26
    %v173 = vpop.f32.mrb[0].mxu0
    %v174 = vadd.f32 %v85, %v173
    %v175 = vpop.f32.mrb[0].mxu0
    %v176 = vadd.f32 %v89, %v175
    %177 = vmatprep.mubr.f32.mxu0 0.0
    %178 = vmatmul.mubr.f32.gmra.mrb[0].mxu0 %v27
    %v179 = vpop.f32.mrb[0].mxu0
    %v180 = vadd.f32 %v85, %v179
    %v181 = vpop.f32.mrb[0].mxu0
    %v182 = vadd.f32 %v89, %v181
    %183 = vmatprep.mubr.f32.mxu0 0.0
    %184 = vmatmul.mubr.f32.gmra.mrb[0].mxu0 %v28
    %v185 = vpop.f32.mrb[0].mxu0
    %v186 = vadd.f32 %v85, %v185
    %v187 = vpop.f32.mrb[0].mxu0
    %v188 = vadd.f32 %v89, %v187
    %189 = vmatprep.mubr.f32.mxu0 0.0
    %190 = vmatmul.mubr.f32.gmra.mrb[0].mxu0 %v29
    %v191 = vpop.f32.mrb[0].mxu0
    %v192 = vadd.f32 %v85, %v191
    %v193 = vpop.f32.mrb[0].mxu0
    %v194 = vadd.f32 %v89, %v193
    %195 = vmatprep.mubr.f32.mxu0 0.0
    %196 = vmatmul.mubr.f32.gmra.mrb[0].mxu0 %v30
    %v197 = vpop.f32.mrb[0].mxu0
    %v198 = vadd.f32 %v85, %v197
    %v199 = vpop.f32.mrb[0].mxu0
    %v200 = vadd.f32 %v89, %v199
    %201 = vmatprep.mubr.f32.mxu0 0.0
    %202 = vmatmul.mubr.f32.gmra.mrb[0].mxu0 %v31
    %v203 = vpop.f32.mrb[0].mxu0
    %v204 = vadd.f32 %v85, %v203
    %v205 = vpop.f32.mrb[0].mxu0
    %v206 = vadd.f32 %v89, %v205
    %207 = vdwg.mxu0
    %208 = vmatprep.subr.mxu0 0.0
    %209 = vmatpush1.msra.mxu0 %v34
    %210 = vmatprep.subr.mxu0 0.0
    %211 = vmatpush1.msra.mxu0 %v37
    %212 = vmatprep.subr.mxu0 0.0
    %213 = vmatpush1.msra.mxu0 %v40
    %214 = vmatprep.subr.mxu0 0.0
    %215 = vmatpush1.msra.mxu0 %v43
    %216 = vmatprep.subr.mxu0 0.0
    %217 = vmatpush1.msra.mxu0 %v46
    %218 = vmatprep.subr.mxu0 0.0
    %219 = vmatpush1.msra.mxu0 %v49
    %220 = vmatprep.subr.mxu0 0.0
    %221 = vmatpush1.msra.mxu0 %v52
    %222 = vmatprep.subr.mxu0 0.0
    %223 = vmatpush1.msra.mxu0 %v55
    %224 = vmatprep.subr.mxu0 0.0
    %225 = vmatpush1.msra.mxu0 %v58
    %226 = vmatprep.subr.mxu0 0.0
    %227 = vmatpush1.msra.mxu0 %v61
    %228 = vmatprep.subr.mxu0 0.0
    %229 = vmatpush1.msra.mxu0 %v64
    %230 = vmatprep.subr.mxu0 0.0
    %231 = vmatpush1.msra.mxu0 %v67
    %232 = vmatprep.subr.mxu0 0.0
    %233 = vmatpush1.msra.mxu0 %v70
    %234 = vmatprep.subr.mxu0 0.0
    %235 = vmatpush1.msra.mxu0 %v73
    %236 = vmatprep.subr.mxu0 0.0
    %237 = vmatpush1.msra.mxu0 %v76
    %238 = vmatprep.subr.mxu0 0.0
    %239 = vmatpush1.msra.mxu0 %v79
    %240 = vmatprep.subr.mxu0 0.0
    %241 = vmatpush1.msra.mxu0 0.0
    %242 = vmatprep.subr.mxu0 0.0
    %243 = vmatpush1.msra.mxu0 0.0
    %244 = vmatprep.subr.mxu0 0.0
    %245 = vmatpush1.msra.mxu0 0.0
    %246 = vmatprep.subr.mxu0 0.0
    %247 = vmatpush1.msra.mxu0 0.0
    %248 = vmatprep.subr.mxu0 0.0
    %249 = vmatpush1.msra.mxu0 0.0
    %250 = vmatprep.subr.mxu0 0.0
    %251 = vmatpush1.msra.mxu0 0.0
    %252 = vmatprep.subr.mxu0 0.0
    %253 = vmatpush1.msra.mxu0 0.0
    %254 = vmatprep.subr.mxu0 0.0
    %255 = vmatpush1.msra.mxu0 0.0
    %256 = vmatprep.subr.mxu0 0.0
    %257 = vmatpush1.msra.mxu0 0.0
    %258 = vmatprep.subr.mxu0 0.0
    %259 = vmatpush1.msra.mxu0 0.0
    %260 = vmatprep.subr.mxu0 0.0
    %261 = vmatpush1.msra.mxu0 0.0
    %262 = vmatprep.subr.mxu0 0.0
    %263 = vmatpush1.msra.mxu0 0.0
    %264 = vmatprep.subr.mxu0 0.0
    %265 = vmatpush1.msra.mxu0 0.0
    %266 = vmatprep.subr.mxu0 0.0
    %267 = vmatpush1.msra.mxu0 0.0
    %268 = vmatprep.subr.mxu0 0.0
    %269 = vmatpush1.msra.mxu0 0.0
    %270 = vmatprep.subr.mxu0 0.0
    %271 = vmatpush1.msra.mxu0 0.0
    %272 = vmatprep.mubr.f32.mxu0 0.0
    %273 = vmatmul.mubr.f32.gmra.mrb[0].mxu0 %v24
    %v274 = vpop.f32.mrb[0].mxu0
    %v275 = vadd.f32 %v93, %v274
    %v276 = vpop.f32.mrb[0].mxu0
    %277 = vmatprep.mubr.f32.mxu0 0.0
    %278 = vmatmul.mubr.f32.gmra.mrb[0].mxu0 %v25
    %v279 = vpop.f32.mrb[0].mxu0
    %v280 = vadd.f32 %v93, %v279
    %v281 = vpop.f32.mrb[0].mxu0
    %282 = vmatprep.mubr.f32.mxu0 0.0
    %283 = vmatmul.mubr.f32.gmra.mrb[0].mxu0 %v26
    %v284 = vpop.f32.mrb[0].mxu0
    %v285 = vadd.f32 %v93, %v284
    %v286 = vpop.f32.mrb[0].mxu0
    %287 = vmatprep.mubr.f32.mxu0 0.0
    %288 = vmatmul.mubr.f32.gmra.mrb[0].mxu0 %v27
    %v289 = vpop.f32.mrb[0].mxu0
    %v290 = vadd.f32 %v93, %v289
    %v291 = vpop.f32.mrb[0].mxu0
    %292 = vmatprep.mubr.f32.mxu0 0.0
    %293 = vmatmul.mubr.f32.gmra.mrb[0].mxu0 %v28
    %v294 = vpop.f32.mrb[0].mxu0
    %v295 = vadd.f32 %v93, %v294
    %v296 = vpop.f32.mrb[0].mxu0
    %297 = vmatprep.mubr.f32.mxu0 0.0
    %298 = vmatmul.mubr.f32.gmra.mrb[0].mxu0 %v29
    %v299 = vpop.f32.mrb[0].mxu0
    %v300 = vadd.f32 %v93, %v299
    %v301 = vpop.f32.mrb[0].mxu0
    %302 = vmatprep.mubr.f32.mxu0 0.0
    %303 = vmatmul.mubr.f32.gmra.mrb[0].mxu0 %v30
    %v304 = vpop.f32.mrb[0].mxu0
    %v305 = vadd.f32 %v93, %v304
    %v306 = vpop.f32.mrb[0].mxu0
    %307 = vmatprep.mubr.f32.mxu0 0.0
    %308 = vmatmul.mubr.f32.gmra.mrb[0].mxu0 %v31
    %v309 = vpop.f32.mrb[0].mxu0
    %v310 = vadd.f32 %v93, %v309
    %v311 = vpop.f32.mrb[0].mxu0
    %312 = vdwg.mxu0
    %v313 = vtanh.pop %v275
    %v314 = vld [vmem:[%s3] sm:$0x7]
    %v316 = vlaneseq
    %v317 = vshrl.u32 %v316, 7
    %v318 = vsub.s32 0, %v317
    %v319 = vrot.slane %v314, %v318
    %v320 = vlaneseq
    %v321 = vshrl.u32 %v320, 7
    %v322 = vsub.s32 1, %v321
    %v323 = vrot.slane %v314, %v322
    %v324 = vlaneseq
    %v325 = vshrl.u32 %v324, 7
    %v326 = vsub.s32 2, %v325
    %v327 = vrot.slane %v314, %v326
    %v331 = vadd.f32 %v168, %v319
    %v332 = vadd.f32 %v170, %v323
    %v333 = vadd.f32 %v280, %v327
    %v334 = vadd.f32 %v174, %v319
    %v335 = vadd.f32 %v176, %v323
    %v336 = vadd.f32 %v285, %v327
    %v337 = vadd.f32 %v180, %v319
    %v338 = vadd.f32 %v182, %v323
    %v339 = vadd.f32 %v290, %v327
    %v340 = vadd.f32 %v186, %v319
    %v341 = vadd.f32 %v188, %v323
    %v342 = vadd.f32 %v295, %v327
    %v343 = vadd.f32 %v192, %v319
    %v344 = vadd.f32 %v194, %v323
    %v345 = vadd.f32 %v300, %v327
    %v346 = vadd.f32 %v198, %v319
    %v347 = vadd.f32 %v200, %v323
    %v348 = vadd.f32 %v305, %v327
    %v349 = vadd.f32 %v204, %v319
    %v350 = vadd.f32 %v206, %v323
    %v351 = vadd.f32 %v310, %v327
    %352 = vst [vmem:[#allocation2] sm:$0xff] %v331
    %353 = vst [vmem:[#allocation2 + $0x8] sm:$0xff] %v332
    %354 = vst [vmem:[#allocation2 + $0x10] sm:$0xff] %v333
    %355 = vst [vmem:[#allocation2 + $0x18] sm:$0xff] %v334
    %356 = vst [vmem:[#allocation2 + $0x20] sm:$0xff] %v335
    %357 = vst [vmem:[#allocation2 + $0x28] sm:$0xff] %v336
    %358 = vst [vmem:[#allocation2 + $0x30] sm:$0xff] %v337
    %359 = vst [vmem:[#allocation2 + $0x38] sm:$0xff] %v338
    %360 = vst [vmem:[#allocation2 + $0x40] sm:$0xff] %v339
    %361 = vst [vmem:[#allocation2 + $0x48] sm:$0xff] %v340
    %362 = vst [vmem:[#allocation2 + $0x50] sm:$0xff] %v341
    %363 = vst [vmem:[#allocation2 + $0x58] sm:$0xff] %v342
    %364 = vst [vmem:[#allocation2 + $0x60] sm:$0xff] %v343
    %365 = vst [vmem:[#allocation2 + $0x68] sm:$0xff] %v344
    %366 = vst [vmem:[#allocation2 + $0x70] sm:$0xff] %v345
    %367 = vst [vmem:[#allocation2 + $0x78] sm:$0xff] %v346
    %368 = vst [vmem:[#allocation2 + $0x80] sm:$0xff] %v347
    %369 = vst [vmem:[#allocation2 + $0x88] sm:$0xff] %v348
    %370 = vst [vmem:[#allocation2 + $0x90] sm:$0xff] %v349
    %371 = vst [vmem:[#allocation2 + $0x98] sm:$0xff] %v350
    %372 = vst [vmem:[#allocation2 + $0xa0] sm:$0xff] %v351
    %v373 = vld [vmem:[%s4] sm:$0xff]
    %v374 = vld [vmem:[%s4 + $0x8] sm:$0xff]
    %v375 = vld [vmem:[%s4 + $0x10] sm:$0xff]
    %v376 = vld [vmem:[%s4 + $0x18] sm:$0xff]
    %v377 = vld [vmem:[%s4 + $0x20] sm:$0xff]
    %v378 = vld [vmem:[%s4 + $0x28] sm:$0xff]
    %v379 = vld [vmem:[%s4 + $0x30] sm:$0xff]
    %v380 = vld [vmem:[%s4 + $0x38] sm:$0xff]
    %v381 = vld [vmem:[%s4 + $0x40] sm:$0xff]
    %v382 = vld [vmem:[%s4 + $0x48] sm:$0xff]
    %v383 = vld [vmem:[%s4 + $0x50] sm:$0xff]
    %v384 = vld [vmem:[%s4 + $0x58] sm:$0xff]
    %v385 = vld [vmem:[%s4 + $0x60] sm:$0xff]
    %v386 = vld [vmem:[%s4 + $0x68] sm:$0xff]
    %v387 = vld [vmem:[%s4 + $0x70] sm:$0xff]
    %v388 = vld [vmem:[%s4 + $0x78] sm:$0xff]
    %v389 = vld [vmem:[%s4 + $0x80] sm:$0xff]
    %v390 = vld [vmem:[%s4 + $0x88] sm:$0xff]
    %v391 = vld [vmem:[%s4 + $0x90] sm:$0xff]
    %v392 = vld [vmem:[%s4 + $0x98] sm:$0xff]
    %v393 = vld [vmem:[%s4 + $0xa0] sm:$0xff]
    %v394 = vld [vmem:[%s4 + $0xa8] sm:$0xff]
    %v395 = vld [vmem:[%s4 + $0xb0] sm:$0xff]
    %v396 = vld [vmem:[%s4 + $0xb8] sm:$0xff]
    %v397 = vld [vmem:[%s4 + $0xc0] sm:$0xff]
    %v398 = vld [vmem:[%s4 + $0xc8] sm:$0xff]
    %v399 = vld [vmem:[%s4 + $0xd0] sm:$0xff]
    %v400 = vld [vmem:[%s4 + $0xd8] sm:$0xff]
    %v401 = vld [vmem:[%s4 + $0xe0] sm:$0xff]
    %v402 = vld [vmem:[%s4 + $0xe8] sm:$0xff]
    %v403 = vld [vmem:[%s4 + $0xf0] sm:$0xff]
    %v404 = vld [vmem:[%s4 + $0xf8] sm:$0xff]
    %v405 = vld [vmem:[%s5] sm:$0xff]
    %v406 = vld [vmem:[%s5 + $0x8] sm:$0xff]
    %v407 = vld [vmem:[%s5 + $0x10] sm:$0xff]
    %v408 = vld [vmem:[%s5 + $0x18] sm:$0xff]
    %v409 = vld [vmem:[%s5 + $0x20] sm:$0xff]
    %v410 = vld [vmem:[%s5 + $0x28] sm:$0xff]
    %v411 = vld [vmem:[%s5 + $0x30] sm:$0xff]
    %v412 = vld [vmem:[%s5 + $0x38] sm:$0xff]
    %v413 = vld [vmem:[%s5 + $0x40] sm:$0xff]
    %v414 = vld [vmem:[%s5 + $0x48] sm:$0xff]
    %v415 = vld [vmem:[%s5 + $0x50] sm:$0xff]
    %v416 = vld [vmem:[%s5 + $0x58] sm:$0xff]
    %v417 = vld [vmem:[%s5 + $0x60] sm:$0xff]
    %v418 = vld [vmem:[%s5 + $0x68] sm:$0xff]
    %v419 = vld [vmem:[%s5 + $0x70] sm:$0xff]
    %v420 = vld [vmem:[%s5 + $0x78] sm:$0xff]
    %v421 = vld [vmem:[#allocation2] sm:$0xff]
    %v422 = vld [vmem:[#allocation2 + $0x8] sm:$0xff]
    %v423 = vld [vmem:[#allocation2 + $0x10] sm:$0xff]
    %424 = vmatprep.subr.mxu0 %v374
    %425 = vmatpush1.msra.mxu0 %v373
    %426 = vmatprep.subr.mxu0 %v376
    %427 = vmatpush1.msra.mxu0 %v375
    %428 = vmatprep.subr.mxu0 %v378
    %429 = vmatpush1.msra.mxu0 %v377
    %430 = vmatprep.subr.mxu0 %v380
    %431 = vmatpush1.msra.mxu0 %v379
    %432 = vmatprep.subr.mxu0 %v382
    %433 = vmatpush1.msra.mxu0 %v381
    %434 = vmatprep.subr.mxu0 %v384
    %435 = vmatpush1.msra.mxu0 %v383
    %436 = vmatprep.subr.mxu0 %v386
    %437 = vmatpush1.msra.mxu0 %v385
    %438 = vmatprep.subr.mxu0 %v388
    %439 = vmatpush1.msra.mxu0 %v387
    %440 = vmatprep.subr.mxu0 %v390
    %441 = vmatpush1.msra.mxu0 %v389
    %442 = vmatprep.subr.mxu0 %v392
    %443 = vmatpush1.msra.mxu0 %v391
    %444 = vmatprep.subr.mxu0 %v394
    %445 = vmatpush1.msra.mxu0 %v393
    %446 = vmatprep.subr.mxu0 %v396
    %447 = vmatpush1.msra.mxu0 %v395
    %448 = vmatprep.subr.mxu0 %v398
    %449 = vmatpush1.msra.mxu0 %v397
    %450 = vmatprep.subr.mxu0 %v400
    %451 = vmatpush1.msra.mxu0 %v399
    %452 = vmatprep.subr.mxu0 %v402
    %453 = vmatpush1.msra.mxu0 %v401
    %454 = vmatprep.subr.mxu0 %v404
    %455 = vmatpush1.msra.mxu0 %v403
    %456 = vmatprep.subr.mxu0 0.0
    %457 = vmatpush1.msra.mxu0 0.0
    %458 = vmatprep.subr.mxu0 0.0
    %459 = vmatpush1.msra.mxu0 0.0
    %460 = vmatprep.subr.mxu0 0.0
    %461 = vmatpush1.msra.mxu0 0.0
    %462 = vmatprep.subr.mxu0 0.0
    %463 = vmatpush1.msra.mxu0 0.0
    %464 = vmatprep.subr.mxu0 0.0
    %465 = vmatpush1.msra.mxu0 0.0
    %466 = vmatprep.subr.mxu0 0.0
    %467 = vmatpush1.msra.mxu0 0.0
    %468 = vmatprep.subr.mxu0 0.0
    %469 = vmatpush1.msra.mxu0 0.0
    %470 = vmatprep.subr.mxu0 0.0
    %471 = vmatpush1.msra.mxu0 0.0
    %472 = vmatprep.subr.mxu0 0.0
    %473 = vmatpush1.msra.mxu0 0.0
    %474 = vmatprep.subr.mxu0 0.0
    %475 = vmatpush1.msra.mxu0 0.0
    %476 = vmatprep.subr.mxu0 0.0
    %477 = vmatpush1.msra.mxu0 0.0
    %478 = vmatprep.subr.mxu0 0.0
    %479 = vmatpush1.msra.mxu0 0.0
    %480 = vmatprep.subr.mxu0 0.0
    %481 = vmatpush1.msra.mxu0 0.0
    %482 = vmatprep.subr.mxu0 0.0
    %483 = vmatpush1.msra.mxu0 0.0
    %484 = vmatprep.subr.mxu0 0.0
    %485 = vmatpush1.msra.mxu0 0.0
    %486 = vmatprep.subr.mxu0 0.0
    %487 = vmatpush1.msra.mxu0 0.0
    %488 = vmatprep.mubr.f32.mxu0 0.0
    %489 = vmatmul.mubr.f32.gmra.mrb[0].mxu0 %v313
    %v490 = vpop.f32.mrb[0].mxu0
    %v491 = vadd.f32 0.0, %v490
    %v492 = vpop.f32.mrb[0].mxu0
    %v493 = vadd.f32 0.0, %v492
    %494 = vdwg.mxu0
    %v495 = vadd.f32 %v421, %v491
    %v496 = vxor.u32 %v495, 2147483648
    %v497 = vmul.f32 %v496, 1.442695
    %v498 = vpow.pop %v497
    %v499 = vadd.f32 %v498, 1.0
    %v500 = vrcp.pop %v499
    %v501 = vmul.f32 1.0, %v500
    %v502 = vmul.f32 %v501, %v313
    %503 = vmatprep.subr.mxu0 0.0
    %504 = vmatpush1.msra.mxu0 %v405
    %505 = vmatprep.subr.mxu0 0.0
    %506 = vmatpush1.msra.mxu0 %v406
    %507 = vmatprep.subr.mxu0 0.0
    %508 = vmatpush1.msra.mxu0 %v407
    %509 = vmatprep.subr.mxu0 0.0
    %510 = vmatpush1.msra.mxu0 %v408
    %511 = vmatprep.subr.mxu0 0.0
    %512 = vmatpush1.msra.mxu0 %v409
    %513 = vmatprep.subr.mxu0 0.0
    %514 = vmatpush1.msra.mxu0 %v410
    %515 = vmatprep.subr.mxu0 0.0
    %516 = vmatpush1.msra.mxu0 %v411
    %517 = vmatprep.subr.mxu0 0.0
    %518 = vmatpush1.msra.mxu0 %v412
    %519 = vmatprep.subr.mxu0 0.0
    %520 = vmatpush1.msra.mxu0 %v413
    %521 = vmatprep.subr.mxu0 0.0
    %522 = vmatpush1.msra.mxu0 %v414
    %523 = vmatprep.subr.mxu0 0.0
    %524 = vmatpush1.msra.mxu0 %v415
    %525 = vmatprep.subr.mxu0 0.0
    %526 = vmatpush1.msra.mxu0 %v416
    %527 = vmatprep.subr.mxu0 0.0
    %528 = vmatpush1.msra.mxu0 %v417
    %529 = vmatprep.subr.mxu0 0.0
    %530 = vmatpush1.msra.mxu0 %v418
    %531 = vmatprep.subr.mxu0 0.0
    %532 = vmatpush1.msra.mxu0 %v419
    %533 = vmatprep.subr.mxu0 0.0
    %534 = vmatpush1.msra.mxu0 %v420
    %535 = vmatprep.subr.mxu0 0.0
    %536 = vmatpush1.msra.mxu0 0.0
    %537 = vmatprep.subr.mxu0 0.0
    %538 = vmatpush1.msra.mxu0 0.0
    %539 = vmatprep.subr.mxu0 0.0
    %540 = vmatpush1.msra.mxu0 0.0
    %541 = vmatprep.subr.mxu0 0.0
    %542 = vmatpush1.msra.mxu0 0.0
    %543 = vmatprep.subr.mxu0 0.0
    %544 = vmatpush1.msra.mxu0 0.0
    %545 = vmatprep.subr.mxu0 0.0
    %546 = vmatpush1.msra.mxu0 0.0
    %547 = vmatprep.subr.mxu0 0.0
    %548 = vmatpush1.msra.mxu0 0.0
    %549 = vmatprep.subr.mxu0 0.0
    %550 = vmatpush1.msra.mxu0 0.0
    %551 = vmatprep.subr.mxu0 0.0
    %552 = vmatpush1.msra.mxu0 0.0
    %553 = vmatprep.subr.mxu0 0.0
    %554 = vmatpush1.msra.mxu0 0.0
    %555 = vmatprep.subr.mxu0 0.0
    %556 = vmatpush1.msra.mxu0 0.0
    %557 = vmatprep.subr.mxu0 0.0
    %558 = vmatpush1.msra.mxu0 0.0
    %559 = vmatprep.subr.mxu0 0.0
    %560 = vmatpush1.msra.mxu0 0.0
    %561 = vmatprep.subr.mxu0 0.0
    %562 = vmatpush1.msra.mxu0 0.0
    %563 = vmatprep.subr.mxu0 0.0
    %564 = vmatpush1.msra.mxu0 0.0
    %565 = vmatprep.subr.mxu0 0.0
    %566 = vmatpush1.msra.mxu0 0.0
    %567 = vmatprep.mubr.f32.mxu0 0.0
    %568 = vmatmul.mubr.f32.gmra.mrb[0].mxu0 %v502
    %v569 = vpop.f32.mrb[0].mxu0
    %v570 = vadd.f32 0.0, %v569
    %v571 = vpop.f32.mrb[0].mxu0
    %572 = vdwg.mxu0
    %v573 = vadd.f32 %v422, %v493
    %v574 = vxor.u32 %v573, 2147483648
    %v575 = vmul.f32 %v574, 1.442695
    %v576 = vpow.pop %v575
    %v577 = vadd.f32 %v576, 1.0
    %v578 = vrcp.pop %v577
    %v579 = vmul.f32 1.0, %v578
    %v580 = vadd.f32 %v423, %v570
    %v581 = vtanh.pop %v580
    %v582 = vsub.f32 %v581, %v313
    %v583 = vmul.f32 %v579, %v582
    %v584 = vadd.f32 %v313, %v583
    %v585 = vadd.f32 %v584, 0.0
    %v586 = vld [vmem:[#allocation2 + $0x18] sm:$0xff]
    %v587 = vld [vmem:[#allocation2 + $0x20] sm:$0xff]
    %v588 = vld [vmem:[#allocation2 + $0x28] sm:$0xff]
    %589 = vmatprep.subr.mxu0 %v374
    %590 = vmatpush1.msra.mxu0 %v373
    %591 = vmatprep.subr.mxu0 %v376
    %592 = vmatpush1.msra.mxu0 %v375
    %593 = vmatprep.subr.mxu0 %v378
    %594 = vmatpush1.msra.mxu0 %v377
    %595 = vmatprep.subr.mxu0 %v380
    %596 = vmatpush1.msra.mxu0 %v379
    %597 = vmatprep.subr.mxu0 %v382
    %598 = vmatpush1.msra.mxu0 %v381
    %599 = vmatprep.subr.mxu0 %v384
    %600 = vmatpush1.msra.mxu0 %v383
    %601 = vmatprep.subr.mxu0 %v386
    %602 = vmatpush1.msra.mxu0 %v385
    %603 = vmatprep.subr.mxu0 %v388
    %604 = vmatpush1.msra.mxu0 %v387
    %605 = vmatprep.subr.mxu0 %v390
    %606 = vmatpush1.msra.mxu0 %v389
    %607 = vmatprep.subr.mxu0 %v392
    %608 = vmatpush1.msra.mxu0 %v391
    %609 = vmatprep.subr.mxu0 %v394
    %610 = vmatpush1.msra.mxu0 %v393
    %611 = vmatprep.subr.mxu0 %v396
    %612 = vmatpush1.msra.mxu0 %v395
    %613 = vmatprep.subr.mxu0 %v398
    %614 = vmatpush1.msra.mxu0 %v397
    %615 = vmatprep.subr.mxu0 %v400
    %616 = vmatpush1.msra.mxu0 %v399
    %617 = vmatprep.subr.mxu0 %v402
    %618 = vmatpush1.msra.mxu0 %v401
    %619 = vmatprep.subr.mxu0 %v404
    %620 = vmatpush1.msra.mxu0 %v403
    %621 = vmatprep.subr.mxu0 0.0
    %622 = vmatpush1.msra.mxu0 0.0
    %623 = vmatprep.subr.mxu0 0.0
    %624 = vmatpush1.msra.mxu0 0.0
    %625 = vmatprep.subr.mxu0 0.0
    %626 = vmatpush1.msra.mxu0 0.0
    %627 = vmatprep.subr.mxu0 0.0
    %628 = vmatpush1.msra.mxu0 0.0
    %629 = vmatprep.subr.mxu0 0.0
    %630 = vmatpush1.msra.mxu0 0.0
    %631 = vmatprep.subr.mxu0 0.0
    %632 = vmatpush1.msra.mxu0 0.0
    %633 = vmatprep.subr.mxu0 0.0
    %634 = vmatpush1.msra.mxu0 0.0
    %635 = vmatprep.subr.mxu0 0.0
    %636 = vmatpush1.msra.mxu0 0.0
    %637 = vmatprep.subr.mxu0 0.0
    %638 = vmatpush1.msra.mxu0 0.0
    %639 = vmatprep.subr.mxu0 0.0
    %640 = vmatpush1.msra.mxu0 0.0
    %641 = vmatprep.subr.mxu0 0.0
    %642 = vmatpush1.msra.mxu0 0.0
    %643 = vmatprep.subr.mxu0 0.0
    %644 = vmatpush1.msra.mxu0 0.0
    %645 = vmatprep.subr.mxu0 0.0
    %646 = vmatpush1.msra.mxu0 0.0
    %647 = vmatprep.subr.mxu0 0.0
    %648 = vmatpush1.msra.mxu0 0.0
    %649 = vmatprep.subr.mxu0 0.0
    %650 = vmatpush1.msra.mxu0 0.0
    %651 = vmatprep.subr.mxu0 0.0
    %652 = vmatpush1.msra.mxu0 0.0
    %653 = vmatprep.mubr.f32.mxu0 0.0
    %654 = vmatmul.mubr.f32.gmra.mrb[0].mxu0 %v584
    %v655 = vpop.f32.mrb[0].mxu0
    %v656 = vadd.f32 0.0, %v655
    %v657 = vpop.f32.mrb[0].mxu0
    %v658 = vadd.f32 0.0, %v657
    %659 = vdwg.mxu0
    %v660 = vadd.f32 %v586, %v656
    %v661 = vxor.u32 %v660, 2147483648
    %v662 = vmul.f32 %v661, 1.442695
    %v663 = vpow.pop %v662
    %v664 = vadd.f32 %v663, 1.0
    %v665 = vrcp.pop %v664
    %v666 = vmul.f32 1.0, %v665
    %v667 = vmul.f32 %v666, %v584
    %668 = vmatprep.subr.mxu0 0.0
    %669 = vmatpush1.msra.mxu0 %v405
    %670 = vmatprep.subr.mxu0 0.0
    %671 = vmatpush1.msra.mxu0 %v406
    %672 = vmatprep.subr.mxu0 0.0
    %673 = vmatpush1.msra.mxu0 %v407
    %674 = vmatprep.subr.mxu0 0.0
    %675 = vmatpush1.msra.mxu0 %v408
    %676 = vmatprep.subr.mxu0 0.0
    %677 = vmatpush1.msra.mxu0 %v409
    %678 = vmatprep.subr.mxu0 0.0
    %679 = vmatpush1.msra.mxu0 %v410
    %680 = vmatprep.subr.mxu0 0.0
    %681 = vmatpush1.msra.mxu0 %v411
    %682 = vmatprep.subr.mxu0 0.0
    %683 = vmatpush1.msra.mxu0 %v412
    %684 = vmatprep.subr.mxu0 0.0
    %685 = vmatpush1.msra.mxu0 %v413
    %686 = vmatprep.subr.mxu0 0.0
    %687 = vmatpush1.msra.mxu0 %v414
    %688 = vmatprep.subr.mxu0 0.0
    %689 = vmatpush1.msra.mxu0 %v415
    %690 = vmatprep.subr.mxu0 0.0
    %691 = vmatpush1.msra.mxu0 %v416
    %692 = vmatprep.subr.mxu0 0.0
    %693 = vmatpush1.msra.mxu0 %v417
    %694 = vmatprep.subr.mxu0 0.0
    %695 = vmatpush1.msra.mxu0 %v418
    %696 = vmatprep.subr.mxu0 0.0
    %697 = vmatpush1.msra.mxu0 %v419
    %698 = vmatprep.subr.mxu0 0.0
    %699 = vmatpush1.msra.mxu0 %v420
    %700 = vmatprep.subr.mxu0 0.0
    %701 = vmatpush1.msra.mxu0 0.0
    %702 = vmatprep.subr.mxu0 0.0
    %703 = vmatpush1.msra.mxu0 0.0
    %704 = vmatprep.subr.mxu0 0.0
    %705 = vmatpush1.msra.mxu0 0.0
    %706 = vmatprep.subr.mxu0 0.0
    %707 = vmatpush1.msra.mxu0 0.0
    %708 = vmatprep.subr.mxu0 0.0
    %709 = vmatpush1.msra.mxu0 0.0
    %710 = vmatprep.subr.mxu0 0.0
    %711 = vmatpush1.msra.mxu0 0.0
    %712 = vmatprep.subr.mxu0 0.0
    %713 = vmatpush1.msra.mxu0 0.0
    %714 = vmatprep.subr.mxu0 0.0
    %715 = vmatpush1.msra.mxu0 0.0
    %716 = vmatprep.subr.mxu0 0.0
    %717 = vmatpush1.msra.mxu0 0.0
    %718 = vmatprep.subr.mxu0 0.0
    %719 = vmatpush1.msra.mxu0 0.0
    %720 = vmatprep.subr.mxu0 0.0
    %721 = vmatpush1.msra.mxu0 0.0
    %722 = vmatprep.subr.mxu0 0.0
    %723 = vmatpush1.msra.mxu0 0.0
    %724 = vmatprep.subr.mxu0 0.0
    %725 = vmatpush1.msra.mxu0 0.0
    %726 = vmatprep.subr.mxu0 0.0
    %727 = vmatpush1.msra.mxu0 0.0
    %728 = vmatprep.subr.mxu0 0.0
    %729 = vmatpush1.msra.mxu0 0.0
    %730 = vmatprep.subr.mxu0 0.0
    %731 = vmatpush1.msra.mxu0 0.0
    %732 = vmatprep.mubr.f32.mxu0 0.0
    %733 = vmatmul.mubr.f32.gmra.mrb[0].mxu0 %v667
    %v734 = vpop.f32.mrb[0].mxu0
    %v735 = vadd.f32 0.0, %v734
    %v736 = vpop.f32.mrb[0].mxu0
    %737 = vdwg.mxu0
    %v738 = vadd.f32 %v587, %v658
    %v739 = vxor.u32 %v738, 2147483648
    %v740 = vmul.f32 %v739, 1.442695
    %v741 = vpow.pop %v740
    %v742 = vadd.f32 %v741, 1.0
    %v743 = vrcp.pop %v742
    %v744 = vmul.f32 1.0, %v743
    %v745 = vadd.f32 %v588, %v735
    %v746 = vtanh.pop %v745
    %v747 = vsub.f32 %v746, %v584
    %v748 = vmul.f32 %v744, %v747
    %v749 = vadd.f32 %v584, %v748
    %v750 = vadd.f32 %v585, %v749
    %v751 = vld [vmem:[#allocation2 + $0x30] sm:$0xff]
    %v752 = vld [vmem:[#allocation2 + $0x38] sm:$0xff]
    %v753 = vld [vmem:[#allocation2 + $0x40] sm:$0xff]
    %754 = vmatprep.subr.mxu0 %v374
    %755 = vmatpush1.msra.mxu0 %v373
    %756 = vmatprep.subr.mxu0 %v376
    %757 = vmatpush1.msra.mxu0 %v375
    %758 = vmatprep.subr.mxu0 %v378
    %759 = vmatpush1.msra.mxu0 %v377
    %760 = vmatprep.subr.mxu0 %v380
    %761 = vmatpush1.msra.mxu0 %v379
    %762 = vmatprep.subr.mxu0 %v382
    %763 = vmatpush1.msra.mxu0 %v381
    %764 = vmatprep.subr.mxu0 %v384
    %765 = vmatpush1.msra.mxu0 %v383
    %766 = vmatprep.subr.mxu0 %v386
    %767 = vmatpush1.msra.mxu0 %v385
    %768 = vmatprep.subr.mxu0 %v388
    %769 = vmatpush1.msra.mxu0 %v387
    %770 = vmatprep.subr.mxu0 %v390
    %771 = vmatpush1.msra.mxu0 %v389
    %772 = vmatprep.subr.mxu0 %v392
    %773 = vmatpush1.msra.mxu0 %v391
    %774 = vmatprep.subr.mxu0 %v394
    %775 = vmatpush1.msra.mxu0 %v393
    %776 = vmatprep.subr.mxu0 %v396
    %777 = vmatpush1.msra.mxu0 %v395
    %778 = vmatprep.subr.mxu0 %v398
    %779 = vmatpush1.msra.mxu0 %v397
    %780 = vmatprep.subr.mxu0 %v400
    %781 = vmatpush1.msra.mxu0 %v399
    %782 = vmatprep.subr.mxu0 %v402
    %783 = vmatpush1.msra.mxu0 %v401
    %784 = vmatprep.subr.mxu0 %v404
    %785 = vmatpush1.msra.mxu0 %v403
    %786 = vmatprep.subr.mxu0 0.0
    %787 = vmatpush1.msra.mxu0 0.0
    %788 = vmatprep.subr.mxu0 0.0
    %789 = vmatpush1.msra.mxu0 0.0
    %790 = vmatprep.subr.mxu0 0.0
    %791 = vmatpush1.msra.mxu0 0.0
    %792 = vmatprep.subr.mxu0 0.0
    %793 = vmatpush1.msra.mxu0 0.0
    %794 = vmatprep.subr.mxu0 0.0
    %795 = vmatpush1.msra.mxu0 0.0
    %796 = vmatprep.subr.mxu0 0.0
    %797 = vmatpush1.msra.mxu0 0.0
    %798 = vmatprep.subr.mxu0 0.0
    %799 = vmatpush1.msra.mxu0 0.0
    %800 = vmatprep.subr.mxu0 0.0
    %801 = vmatpush1.msra.mxu0 0.0
    %802 = vmatprep.subr.mxu0 0.0
    %803 = vmatpush1.msra.mxu0 0.0
    %804 = vmatprep.subr.mxu0 0.0
    %805 = vmatpush1.msra.mxu0 0.0
    %806 = vmatprep.subr.mxu0 0.0
    %807 = vmatpush1.msra.mxu0 0.0
    %808 = vmatprep.subr.mxu0 0.0
    %809 = vmatpush1.msra.mxu0 0.0
    %810 = vmatprep.subr.mxu0 0.0
    %811 = vmatpush1.msra.mxu0 0.0
    %812 = vmatprep.subr.mxu0 0.0
    %813 = vmatpush1.msra.mxu0 0.0
    %814 = vmatprep.subr.mxu0 0.0
    %815 = vmatpush1.msra.mxu0 0.0
    %816 = vmatprep.subr.mxu0 0.0
    %817 = vmatpush1.msra.mxu0 0.0
    %818 = vmatprep.mubr.f32.mxu0 0.0
    %819 = vmatmul.mubr.f32.gmra.mrb[0].mxu0 %v749
    %v820 = vpop.f32.mrb[0].mxu0
    %v821 = vadd.f32 0.0, %v820
    %v822 = vpop.f32.mrb[0].mxu0
    %v823 = vadd.f32 0.0, %v822
    %824 = vdwg.mxu0
    %v825 = vadd.f32 %v751, %v821
    %v826 = vxor.u32 %v825, 2147483648
    %v827 = vmul.f32 %v826, 1.442695
    %v828 = vpow.pop %v827
    %v829 = vadd.f32 %v828, 1.0
    %v830 = vrcp.pop %v829
    %v831 = vmul.f32 1.0, %v830
    %v832 = vmul.f32 %v831, %v749
    %833 = vmatprep.subr.mxu0 0.0
    %834 = vmatpush1.msra.mxu0 %v405
    %835 = vmatprep.subr.mxu0 0.0
    %836 = vmatpush1.msra.mxu0 %v406
    %837 = vmatprep.subr.mxu0 0.0
    %838 = vmatpush1.msra.mxu0 %v407
    %839 = vmatprep.subr.mxu0 0.0
    %840 = vmatpush1.msra.mxu0 %v408
    %841 = vmatprep.subr.mxu0 0.0
    %842 = vmatpush1.msra.mxu0 %v409
    %843 = vmatprep.subr.mxu0 0.0
    %844 = vmatpush1.msra.mxu0 %v410
    %845 = vmatprep.subr.mxu0 0.0
    %846 = vmatpush1.msra.mxu0 %v411
    %847 = vmatprep.subr.mxu0 0.0
    %848 = vmatpush1.msra.mxu0 %v412
    %849 = vmatprep.subr.mxu0 0.0
    %850 = vmatpush1.msra.mxu0 %v413
    %851 = vmatprep.subr.mxu0 0.0
    %852 = vmatpush1.msra.mxu0 %v414
    %853 = vmatprep.subr.mxu0 0.0
    %854 = vmatpush1.msra.mxu0 %v415
    %855 = vmatprep.subr.mxu0 0.0
    %856 = vmatpush1.msra.mxu0 %v416
    %857 = vmatprep.subr.mxu0 0.0
    %858 = vmatpush1.msra.mxu0 %v417
    %859 = vmatprep.subr.mxu0 0.0
    %860 = vmatpush1.msra.mxu0 %v418
    %861 = vmatprep.subr.mxu0 0.0
    %862 = vmatpush1.msra.mxu0 %v419
    %863 = vmatprep.subr.mxu0 0.0
    %864 = vmatpush1.msra.mxu0 %v420
    %865 = vmatprep.subr.mxu0 0.0
    %866 = vmatpush1.msra.mxu0 0.0
    %867 = vmatprep.subr.mxu0 0.0
    %868 = vmatpush1.msra.mxu0 0.0
    %869 = vmatprep.subr.mxu0 0.0
    %870 = vmatpush1.msra.mxu0 0.0
    %871 = vmatprep.subr.mxu0 0.0
    %872 = vmatpush1.msra.mxu0 0.0
    %873 = vmatprep.subr.mxu0 0.0
    %874 = vmatpush1.msra.mxu0 0.0
    %875 = vmatprep.subr.mxu0 0.0
    %876 = vmatpush1.msra.mxu0 0.0
    %877 = vmatprep.subr.mxu0 0.0
    %878 = vmatpush1.msra.mxu0 0.0
    %879 = vmatprep.subr.mxu0 0.0
    %880 = vmatpush1.msra.mxu0 0.0
    %881 = vmatprep.subr.mxu0 0.0
    %882 = vmatpush1.msra.mxu0 0.0
    %883 = vmatprep.subr.mxu0 0.0
    %884 = vmatpush1.msra.mxu0 0.0
    %885 = vmatprep.subr.mxu0 0.0
    %886 = vmatpush1.msra.mxu0 0.0
    %887 = vmatprep.subr.mxu0 0.0
    %888 = vmatpush1.msra.mxu0 0.0
    %889 = vmatprep.subr.mxu0 0.0
    %890 = vmatpush1.msra.mxu0 0.0
    %891 = vmatprep.subr.mxu0 0.0
    %892 = vmatpush1.msra.mxu0 0.0
    %893 = vmatprep.subr.mxu0 0.0
    %894 = vmatpush1.msra.mxu0 0.0
    %895 = vmatprep.subr.mxu0 0.0
    %896 = vmatpush1.msra.mxu0 0.0
    %897 = vmatprep.mubr.f32.mxu0 0.0
    %898 = vmatmul.mubr.f32.gmra.mrb[0].mxu0 %v832
    %v899 = vpop.f32.mrb[0].mxu0
    %v900 = vadd.f32 0.0, %v899
    %v901 = vpop.f32.mrb[0].mxu0
    %902 = vdwg.mxu0
    %v903 = vadd.f32 %v752, %v823
    %v904 = vxor.u32 %v903, 2147483648
    %v905 = vmul.f32 %v904, 1.442695
    %v906 = vpow.pop %v905
    %v907 = vadd.f32 %v906, 1.0
    %v908 = vrcp.pop %v907
    %v909 = vmul.f32 1.0, %v908
    %v910 = vadd.f32 %v753, %v900
    %v911 = vtanh.pop %v910
    %v912 = vsub.f32 %v911, %v749
    %v913 = vmul.f32 %v909, %v912
    %v914 = vadd.f32 %v749, %v913
    %v915 = vadd.f32 %v750, %v914
    %v916 = vld [vmem:[#allocation2 + $0x48] sm:$0xff]
    %v917 = vld [vmem:[#allocation2 + $0x50] sm:$0xff]
    %v918 = vld [vmem:[#allocation2 + $0x58] sm:$0xff]
    %919 = vmatprep.subr.mxu0 %v374
    %920 = vmatpush1.msra.mxu0 %v373
    %921 = vmatprep.subr.mxu0 %v376
    %922 = vmatpush1.msra.mxu0 %v375
    %923 = vmatprep.subr.mxu0 %v378
    %924 = vmatpush1.msra.mxu0 %v377
    %925 = vmatprep.subr.mxu0 %v380
    %926 = vmatpush1.msra.mxu0 %v379
    %927 = vmatprep.subr.mxu0 %v382
    %928 = vmatpush1.msra.mxu0 %v381
    %929 = vmatprep.subr.mxu0 %v384
    %930 = vmatpush1.msra.mxu0 %v383
    %931 = vmatprep.subr.mxu0 %v386
    %932 = vmatpush1.msra.mxu0 %v385
    %933 = vmatprep.subr.mxu0 %v388
    %934 = vmatpush1.msra.mxu0 %v387
    %935 = vmatprep.subr.mxu0 %v390
    %936 = vmatpush1.msra.mxu0 %v389
    %937 = vmatprep.subr.mxu0 %v392
    %938 = vmatpush1.msra.mxu0 %v391
    %939 = vmatprep.subr.mxu0 %v394
    %940 = vmatpush1.msra.mxu0 %v393
    %941 = vmatprep.subr.mxu0 %v396
    %942 = vmatpush1.msra.mxu0 %v395
    %943 = vmatprep.subr.mxu0 %v398
    %944 = vmatpush1.msra.mxu0 %v397
    %945 = vmatprep.subr.mxu0 %v400
    %946 = vmatpush1.msra.mxu0 %v399
    %947 = vmatprep.subr.mxu0 %v402
    %948 = vmatpush1.msra.mxu0 %v401
    %949 = vmatprep.subr.mxu0 %v404
    %950 = vmatpush1.msra.mxu0 %v403
    %951 = vmatprep.subr.mxu0 0.0
    %952 = vmatpush1.msra.mxu0 0.0
    %953 = vmatprep.subr.mxu0 0.0
    %954 = vmatpush1.msra.mxu0 0.0
    %955 = vmatprep.subr.mxu0 0.0
    %956 = vmatpush1.msra.mxu0 0.0
    %957 = vmatprep.subr.mxu0 0.0
    %958 = vmatpush1.msra.mxu0 0.0
    %959 = vmatprep.subr.mxu0 0.0
    %960 = vmatpush1.msra.mxu0 0.0
    %961 = vmatprep.subr.mxu0 0.0
    %962 = vmatpush1.msra.mxu0 0.0
    %963 = vmatprep.subr.mxu0 0.0
    %964 = vmatpush1.msra.mxu0 0.0
    %965 = vmatprep.subr.mxu0 0.0
    %966 = vmatpush1.msra.mxu0 0.0
    %967 = vmatprep.subr.mxu0 0.0
    %968 = vmatpush1.msra.mxu0 0.0
    %969 = vmatprep.subr.mxu0 0.0
    %970 = vmatpush1.msra.mxu0 0.0
    %971 = vmatprep.subr.mxu0 0.0
    %972 = vmatpush1.msra.mxu0 0.0
    %973 = vmatprep.subr.mxu0 0.0
    %974 = vmatpush1.msra.mxu0 0.0
    %975 = vmatprep.subr.mxu0 0.0
    %976 = vmatpush1.msra.mxu0 0.0
    %977 = vmatprep.subr.mxu0 0.0
    %978 = vmatpush1.msra.mxu0 0.0
    %979 = vmatprep.subr.mxu0 0.0
    %980 = vmatpush1.msra.mxu0 0.0
    %981 = vmatprep.subr.mxu0 0.0
    %982 = vmatpush1.msra.mxu0 0.0
    %983 = vmatprep.mubr.f32.mxu0 0.0
    %984 = vmatmul.mubr.f32.gmra.mrb[0].mxu0 %v914
    %v985 = vpop.f32.mrb[0].mxu0
    %v986 = vadd.f32 0.0, %v985
    %v987 = vpop.f32.mrb[0].mxu0
    %v988 = vadd.f32 0.0, %v987
    %989 = vdwg.mxu0
    %v990 = vadd.f32 %v916, %v986
    %v991 = vxor.u32 %v990, 2147483648
    %v992 = vmul.f32 %v991, 1.442695
    %v993 = vpow.pop %v992
    %v994 = vadd.f32 %v993, 1.0
    %v995 = vrcp.pop %v994
    %v996 = vmul.f32 1.0, %v995
    %v997 = vmul.f32 %v996, %v914
    %998 = vmatprep.subr.mxu0 0.0
    %999 = vmatpush1.msra.mxu0 %v405
    %1000 = vmatprep.subr.mxu0 0.0
    %1001 = vmatpush1.msra.mxu0 %v406
    %1002 = vmatprep.subr.mxu0 0.0
    %1003 = vmatpush1.msra.mxu0 %v407
    %1004 = vmatprep.subr.mxu0 0.0
    %1005 = vmatpush1.msra.mxu0 %v408
    %1006 = vmatprep.subr.mxu0 0.0
    %1007 = vmatpush1.msra.mxu0 %v409
    %1008 = vmatprep.subr.mxu0 0.0
    %1009 = vmatpush1.msra.mxu0 %v410
    %1010 = vmatprep.subr.mxu0 0.0
    %1011 = vmatpush1.msra.mxu0 %v411
    %1012 = vmatprep.subr.mxu0 0.0
    %1013 = vmatpush1.msra.mxu0 %v412
    %1014 = vmatprep.subr.mxu0 0.0
    %1015 = vmatpush1.msra.mxu0 %v413
    %1016 = vmatprep.subr.mxu0 0.0
    %1017 = vmatpush1.msra.mxu0 %v414
    %1018 = vmatprep.subr.mxu0 0.0
    %1019 = vmatpush1.msra.mxu0 %v415
    %1020 = vmatprep.subr.mxu0 0.0
    %1021 = vmatpush1.msra.mxu0 %v416
    %1022 = vmatprep.subr.mxu0 0.0
    %1023 = vmatpush1.msra.mxu0 %v417
    %1024 = vmatprep.subr.mxu0 0.0
    %1025 = vmatpush1.msra.mxu0 %v418
    %1026 = vmatprep.subr.mxu0 0.0
    %1027 = vmatpush1.msra.mxu0 %v419
    %1028 = vmatprep.subr.mxu0 0.0
    %1029 = vmatpush1.msra.mxu0 %v420
    %1030 = vmatprep.subr.mxu0 0.0
    %1031 = vmatpush1.msra.mxu0 0.0
    %1032 = vmatprep.subr.mxu0 0.0
    %1033 = vmatpush1.msra.mxu0 0.0
    %1034 = vmatprep.subr.mxu0 0.0
    %1035 = vmatpush1.msra.mxu0 0.0
    %1036 = vmatprep.subr.mxu0 0.0
    %1037 = vmatpush1.msra.mxu0 0.0
    %1038 = vmatprep.subr.mxu0 0.0
    %1039 = vmatpush1.msra.mxu0 0.0
    %1040 = vmatprep.subr.mxu0 0.0
    %1041 = vmatpush1.msra.mxu0 0.0
    %1042 = vmatprep.subr.mxu0 0.0
    %1043 = vmatpush1.msra.mxu0 0.0
    %1044 = vmatprep.subr.mxu0 0.0
    %1045 = vmatpush1.msra.mxu0 0.0
    %1046 = vmatprep.subr.mxu0 0.0
    %1047 = vmatpush1.msra.mxu0 0.0
    %1048 = vmatprep.subr.mxu0 0.0
    %1049 = vmatpush1.msra.mxu0 0.0
    %1050 = vmatprep.subr.mxu0 0.0
    %1051 = vmatpush1.msra.mxu0 0.0
    %1052 = vmatprep.subr.mxu0 0.0
    %1053 = vmatpush1.msra.mxu0 0.0
    %1054 = vmatprep.subr.mxu0 0.0
    %1055 = vmatpush1.msra.mxu0 0.0
    %1056 = vmatprep.subr.mxu0 0.0
    %1057 = vmatpush1.msra.mxu0 0.0
    %1058 = vmatprep.subr.mxu0 0.0
    %1059 = vmatpush1.msra.mxu0 0.0
    %1060 = vmatprep.subr.mxu0 0.0
    %1061 = vmatpush1.msra.mxu0 0.0
    %1062 = vmatprep.mubr.f32.mxu0 0.0
    %1063 = vmatmul.mubr.f32.gmra.mrb[0].mxu0 %v997
    %v1064 = vpop.f32.mrb[0].mxu0
    %v1065 = vadd.f32 0.0, %v1064
    %v1066 = vpop.f32.mrb[0].mxu0
    %1067 = vdwg.mxu0
    %v1068 = vadd.f32 %v917, %v988
    %v1069 = vxor.u32 %v1068, 2147483648
    %v1070 = vmul.f32 %v1069, 1.442695
    %v1071 = vpow.pop %v1070
    %v1072 = vadd.f32 %v1071, 1.0
    %v1073 = vrcp.pop %v1072
    %v1074 = vmul.f32 1.0, %v1073
    %v1075 = vadd.f32 %v918, %v1065
    %v1076 = vtanh.pop %v1075
    %v1077 = vsub.f32 %v1076, %v914
    %v1078 = vmul.f32 %v1074, %v1077
    %v1079 = vadd.f32 %v914, %v1078
    %v1080 = vadd.f32 %v915, %v1079
    %v1081 = vld [vmem:[#allocation2 + $0x60] sm:$0xff]
    %v1082 = vld [vmem:[#allocation2 + $0x68] sm:$0xff]
    %v1083 = vld [vmem:[#allocation2 + $0x70] sm:$0xff]
    %1084 = vmatprep.subr.mxu0 %v374
    %1085 = vmatpush1.msra.mxu0 %v373
    %1086 = vmatprep.subr.mxu0 %v376
    %1087 = vmatpush1.msra.mxu0 %v375
    %1088 = vmatprep.subr.mxu0 %v378
    %1089 = vmatpush1.msra.mxu0 %v377
    %1090 = vmatprep.subr.mxu0 %v380
    %1091 = vmatpush1.msra.mxu0 %v379
    %1092 = vmatprep.subr.mxu0 %v382
    %1093 = vmatpush1.msra.mxu0 %v381
    %1094 = vmatprep.subr.mxu0 %v384
    %1095 = vmatpush1.msra.mxu0 %v383
    %1096 = vmatprep.subr.mxu0 %v386
    %1097 = vmatpush1.msra.mxu0 %v385
    %1098 = vmatprep.subr.mxu0 %v388
    %1099 = vmatpush1.msra.mxu0 %v387
    %1100 = vmatprep.subr.mxu0 %v390
    %1101 = vmatpush1.msra.mxu0 %v389
    %1102 = vmatprep.subr.mxu0 %v392
    %1103 = vmatpush1.msra.mxu0 %v391
    %1104 = vmatprep.subr.mxu0 %v394
    %1105 = vmatpush1.msra.mxu0 %v393
    %1106 = vmatprep.subr.mxu0 %v396
    %1107 = vmatpush1.msra.mxu0 %v395
    %1108 = vmatprep.subr.mxu0 %v398
    %1109 = vmatpush1.msra.mxu0 %v397
    %1110 = vmatprep.subr.mxu0 %v400
    %1111 = vmatpush1.msra.mxu0 %v399
    %1112 = vmatprep.subr.mxu0 %v402
    %1113 = vmatpush1.msra.mxu0 %v401
    %1114 = vmatprep.subr.mxu0 %v404
    %1115 = vmatpush1.msra.mxu0 %v403
    %1116 = vmatprep.subr.mxu0 0.0
    %1117 = vmatpush1.msra.mxu0 0.0
    %1118 = vmatprep.subr.mxu0 0.0
    %1119 = vmatpush1.msra.mxu0 0.0
    %1120 = vmatprep.subr.mxu0 0.0
    %1121 = vmatpush1.msra.mxu0 0.0
    %1122 = vmatprep.subr.mxu0 0.0
    %1123 = vmatpush1.msra.mxu0 0.0
    %1124 = vmatprep.subr.mxu0 0.0
    %1125 = vmatpush1.msra.mxu0 0.0
    %1126 = vmatprep.subr.mxu0 0.0
    %1127 = vmatpush1.msra.mxu0 0.0
    %1128 = vmatprep.subr.mxu0 0.0
    %1129 = vmatpush1.msra.mxu0 0.0
    %1130 = vmatprep.subr.mxu0 0.0
    %1131 = vmatpush1.msra.mxu0 0.0
    %1132 = vmatprep.subr.mxu0 0.0
    %1133 = vmatpush1.msra.mxu0 0.0
    %1134 = vmatprep.subr.mxu0 0.0
    %1135 = vmatpush1.msra.mxu0 0.0
    %1136 = vmatprep.subr.mxu0 0.0
    %1137 = vmatpush1.msra.mxu0 0.0
    %1138 = vmatprep.subr.mxu0 0.0
    %1139 = vmatpush1.msra.mxu0 0.0
    %1140 = vmatprep.subr.mxu0 0.0
    %1141 = vmatpush1.msra.mxu0 0.0
    %1142 = vmatprep.subr.mxu0 0.0
    %1143 = vmatpush1.msra.mxu0 0.0
    %1144 = vmatprep.subr.mxu0 0.0
    %1145 = vmatpush1.msra.mxu0 0.0
    %1146 = vmatprep.subr.mxu0 0.0
    %1147 = vmatpush1.msra.mxu0 0.0
    %1148 = vmatprep.mubr.f32.mxu0 0.0
    %1149 = vmatmul.mubr.f32.gmra.mrb[0].mxu0 %v1079
    %v1150 = vpop.f32.mrb[0].mxu0
    %v1151 = vadd.f32 0.0, %v1150
    %v1152 = vpop.f32.mrb[0].mxu0
    %v1153 = vadd.f32 0.0, %v1152
    %1154 = vdwg.mxu0
    %v1155 = vadd.f32 %v1081, %v1151
    %v1156 = vxor.u32 %v1155, 2147483648
    %v1157 = vmul.f32 %v1156, 1.442695
    %v1158 = vpow.pop %v1157
    %v1159 = vadd.f32 %v1158, 1.0
    %v1160 = vrcp.pop %v1159
    %v1161 = vmul.f32 1.0, %v1160
    %v1162 = vmul.f32 %v1161, %v1079
    %1163 = vmatprep.subr.mxu0 0.0
    %1164 = vmatpush1.msra.mxu0 %v405
    %1165 = vmatprep.subr.mxu0 0.0
    %1166 = vmatpush1.msra.mxu0 %v406
    %1167 = vmatprep.subr.mxu0 0.0
    %1168 = vmatpush1.msra.mxu0 %v407
    %1169 = vmatprep.subr.mxu0 0.0
    %1170 = vmatpush1.msra.mxu0 %v408
    %1171 = vmatprep.subr.mxu0 0.0
    %1172 = vmatpush1.msra.mxu0 %v409
    %1173 = vmatprep.subr.mxu0 0.0
    %1174 = vmatpush1.msra.mxu0 %v410
    %1175 = vmatprep.subr.mxu0 0.0
    %1176 = vmatpush1.msra.mxu0 %v411
    %1177 = vmatprep.subr.mxu0 0.0
    %1178 = vmatpush1.msra.mxu0 %v412
    %1179 = vmatprep.subr.mxu0 0.0
    %1180 = vmatpush1.msra.mxu0 %v413
    %1181 = vmatprep.subr.mxu0 0.0
    %1182 = vmatpush1.msra.mxu0 %v414
    %1183 = vmatprep.subr.mxu0 0.0
    %1184 = vmatpush1.msra.mxu0 %v415
    %1185 = vmatprep.subr.mxu0 0.0
    %1186 = vmatpush1.msra.mxu0 %v416
    %1187 = vmatprep.subr.mxu0 0.0
    %1188 = vmatpush1.msra.mxu0 %v417
    %1189 = vmatprep.subr.mxu0 0.0
    %1190 = vmatpush1.msra.mxu0 %v418
    %1191 = vmatprep.subr.mxu0 0.0
    %1192 = vmatpush1.msra.mxu0 %v419
    %1193 = vmatprep.subr.mxu0 0.0
    %1194 = vmatpush1.msra.mxu0 %v420
    %1195 = vmatprep.subr.mxu0 0.0
    %1196 = vmatpush1.msra.mxu0 0.0
    %1197 = vmatprep.subr.mxu0 0.0
    %1198 = vmatpush1.msra.mxu0 0.0
    %1199 = vmatprep.subr.mxu0 0.0
    %1200 = vmatpush1.msra.mxu0 0.0
    %1201 = vmatprep.subr.mxu0 0.0
    %1202 = vmatpush1.msra.mxu0 0.0
    %1203 = vmatprep.subr.mxu0 0.0
    %1204 = vmatpush1.msra.mxu0 0.0
    %1205 = vmatprep.subr.mxu0 0.0
    %1206 = vmatpush1.msra.mxu0 0.0
    %1207 = vmatprep.subr.mxu0 0.0
    %1208 = vmatpush1.msra.mxu0 0.0
    %1209 = vmatprep.subr.mxu0 0.0
    %1210 = vmatpush1.msra.mxu0 0.0
    %1211 = vmatprep.subr.mxu0 0.0
    %1212 = vmatpush1.msra.mxu0 0.0
    %1213 = vmatprep.subr.mxu0 0.0
    %1214 = vmatpush1.msra.mxu0 0.0
    %1215 = vmatprep.subr.mxu0 0.0
    %1216 = vmatpush1.msra.mxu0 0.0
    %1217 = vmatprep.subr.mxu0 0.0
    %1218 = vmatpush1.msra.mxu0 0.0
    %1219 = vmatprep.subr.mxu0 0.0
    %1220 = vmatpush1.msra.mxu0 0.0
    %1221 = vmatprep.subr.mxu0 0.0
    %1222 = vmatpush1.msra.mxu0 0.0
    %1223 = vmatprep.subr.mxu0 0.0
    %1224 = vmatpush1.msra.mxu0 0.0
    %1225 = vmatprep.subr.mxu0 0.0
    %1226 = vmatpush1.msra.mxu0 0.0
    %1227 = vmatprep.mubr.f32.mxu0 0.0
    %1228 = vmatmul.mubr.f32.gmra.mrb[0].mxu0 %v1162
    %v1229 = vpop.f32.mrb[0].mxu0
    %v1230 = vadd.f32 0.0, %v1229
    %v1231 = vpop.f32.mrb[0].mxu0
    %1232 = vdwg.mxu0
    %v1233 = vadd.f32 %v1082, %v1153
    %v1234 = vxor.u32 %v1233, 2147483648
    %v1235 = vmul.f32 %v1234, 1.442695
    %v1236 = vpow.pop %v1235
    %v1237 = vadd.f32 %v1236, 1.0
    %v1238 = vrcp.pop %v1237
    %v1239 = vmul.f32 1.0, %v1238
    %v1240 = vadd.f32 %v1083, %v1230
    %v1241 = vtanh.pop %v1240
    %v1242 = vsub.f32 %v1241, %v1079
    %v1243 = vmul.f32 %v1239, %v1242
    %v1244 = vadd.f32 %v1079, %v1243
    %v1245 = vadd.f32 %v1080, %v1244
    %v1246 = vld [vmem:[#allocation2 + $0x78] sm:$0xff]
    %v1247 = vld [vmem:[#allocation2 + $0x80] sm:$0xff]
    %v1248 = vld [vmem:[#allocation2 + $0x88] sm:$0xff]
    %1249 = vmatprep.subr.mxu0 %v374
    %1250 = vmatpush1.msra.mxu0 %v373
    %1251 = vmatprep.subr.mxu0 %v376
    %1252 = vmatpush1.msra.mxu0 %v375
    %1253 = vmatprep.subr.mxu0 %v378
    %1254 = vmatpush1.msra.mxu0 %v377
    %1255 = vmatprep.subr.mxu0 %v380
    %1256 = vmatpush1.msra.mxu0 %v379
    %1257 = vmatprep.subr.mxu0 %v382
    %1258 = vmatpush1.msra.mxu0 %v381
    %1259 = vmatprep.subr.mxu0 %v384
    %1260 = vmatpush1.msra.mxu0 %v383
    %1261 = vmatprep.subr.mxu0 %v386
    %1262 = vmatpush1.msra.mxu0 %v385
    %1263 = vmatprep.subr.mxu0 %v388
    %1264 = vmatpush1.msra.mxu0 %v387
    %1265 = vmatprep.subr.mxu0 %v390
    %1266 = vmatpush1.msra.mxu0 %v389
    %1267 = vmatprep.subr.mxu0 %v392
    %1268 = vmatpush1.msra.mxu0 %v391
    %1269 = vmatprep.subr.mxu0 %v394
    %1270 = vmatpush1.msra.mxu0 %v393
    %1271 = vmatprep.subr.mxu0 %v396
    %1272 = vmatpush1.msra.mxu0 %v395
    %1273 = vmatprep.subr.mxu0 %v398
    %1274 = vmatpush1.msra.mxu0 %v397
    %1275 = vmatprep.subr.mxu0 %v400
    %1276 = vmatpush1.msra.mxu0 %v399
    %1277 = vmatprep.subr.mxu0 %v402
    %1278 = vmatpush1.msra.mxu0 %v401
    %1279 = vmatprep.subr.mxu0 %v404
    %1280 = vmatpush1.msra.mxu0 %v403
    %1281 = vmatprep.subr.mxu0 0.0
    %1282 = vmatpush1.msra.mxu0 0.0
    %1283 = vmatprep.subr.mxu0 0.0
    %1284 = vmatpush1.msra.mxu0 0.0
    %1285 = vmatprep.subr.mxu0 0.0
    %1286 = vmatpush1.msra.mxu0 0.0
    %1287 = vmatprep.subr.mxu0 0.0
    %1288 = vmatpush1.msra.mxu0 0.0
    %1289 = vmatprep.subr.mxu0 0.0
    %1290 = vmatpush1.msra.mxu0 0.0
    %1291 = vmatprep.subr.mxu0 0.0
    %1292 = vmatpush1.msra.mxu0 0.0
    %1293 = vmatprep.subr.mxu0 0.0
    %1294 = vmatpush1.msra.mxu0 0.0
    %1295 = vmatprep.subr.mxu0 0.0
    %1296 = vmatpush1.msra.mxu0 0.0
    %1297 = vmatprep.subr.mxu0 0.0
    %1298 = vmatpush1.msra.mxu0 0.0
    %1299 = vmatprep.subr.mxu0 0.0
    %1300 = vmatpush1.msra.mxu0 0.0
    %1301 = vmatprep.subr.mxu0 0.0
    %1302 = vmatpush1.msra.mxu0 0.0
    %1303 = vmatprep.subr.mxu0 0.0
    %1304 = vmatpush1.msra.mxu0 0.0
    %1305 = vmatprep.subr.mxu0 0.0
    %1306 = vmatpush1.msra.mxu0 0.0
    %1307 = vmatprep.subr.mxu0 0.0
    %1308 = vmatpush1.msra.mxu0 0.0
    %1309 = vmatprep.subr.mxu0 0.0
    %1310 = vmatpush1.msra.mxu0 0.0
    %1311 = vmatprep.subr.mxu0 0.0
    %1312 = vmatpush1.msra.mxu0 0.0
    %1313 = vmatprep.mubr.f32.mxu0 0.0
    %1314 = vmatmul.mubr.f32.gmra.mrb[0].mxu0 %v1244
    %v1315 = vpop.f32.mrb[0].mxu0
    %v1316 = vadd.f32 0.0, %v1315
    %v1317 = vpop.f32.mrb[0].mxu0
    %v1318 = vadd.f32 0.0, %v1317
    %1319 = vdwg.mxu0
    %v1320 = vadd.f32 %v1246, %v1316
    %v1321 = vxor.u32 %v1320, 2147483648
    %v1322 = vmul.f32 %v1321, 1.442695
    %v1323 = vpow.pop %v1322
    %v1324 = vadd.f32 %v1323, 1.0
    %v1325 = vrcp.pop %v1324
    %v1326 = vmul.f32 1.0, %v1325
    %v1327 = vmul.f32 %v1326, %v1244
    %1328 = vmatprep.subr.mxu0 0.0
    %1329 = vmatpush1.msra.mxu0 %v405
    %1330 = vmatprep.subr.mxu0 0.0
    %1331 = vmatpush1.msra.mxu0 %v406
    %1332 = vmatprep.subr.mxu0 0.0
    %1333 = vmatpush1.msra.mxu0 %v407
    %1334 = vmatprep.subr.mxu0 0.0
    %1335 = vmatpush1.msra.mxu0 %v408
    %1336 = vmatprep.subr.mxu0 0.0
    %1337 = vmatpush1.msra.mxu0 %v409
    %1338 = vmatprep.subr.mxu0 0.0
    %1339 = vmatpush1.msra.mxu0 %v410
    %1340 = vmatprep.subr.mxu0 0.0
    %1341 = vmatpush1.msra.mxu0 %v411
    %1342 = vmatprep.subr.mxu0 0.0
    %1343 = vmatpush1.msra.mxu0 %v412
    %1344 = vmatprep.subr.mxu0 0.0
    %1345 = vmatpush1.msra.mxu0 %v413
    %1346 = vmatprep.subr.mxu0 0.0
    %1347 = vmatpush1.msra.mxu0 %v414
    %1348 = vmatprep.subr.mxu0 0.0
    %1349 = vmatpush1.msra.mxu0 %v415
    %1350 = vmatprep.subr.mxu0 0.0
    %1351 = vmatpush1.msra.mxu0 %v416
    %1352 = vmatprep.subr.mxu0 0.0
    %1353 = vmatpush1.msra.mxu0 %v417
    %1354 = vmatprep.subr.mxu0 0.0
    %1355 = vmatpush1.msra.mxu0 %v418
    %1356 = vmatprep.subr.mxu0 0.0
    %1357 = vmatpush1.msra.mxu0 %v419
    %1358 = vmatprep.subr.mxu0 0.0
    %1359 = vmatpush1.msra.mxu0 %v420
    %1360 = vmatprep.subr.mxu0 0.0
    %1361 = vmatpush1.msra.mxu0 0.0
    %1362 = vmatprep.subr.mxu0 0.0
    %1363 = vmatpush1.msra.mxu0 0.0
    %1364 = vmatprep.subr.mxu0 0.0
    %1365 = vmatpush1.msra.mxu0 0.0
    %1366 = vmatprep.subr.mxu0 0.0
    %1367 = vmatpush1.msra.mxu0 0.0
    %1368 = vmatprep.subr.mxu0 0.0
    %1369 = vmatpush1.msra.mxu0 0.0
    %1370 = vmatprep.subr.mxu0 0.0
    %1371 = vmatpush1.msra.mxu0 0.0
    %1372 = vmatprep.subr.mxu0 0.0
    %1373 = vmatpush1.msra.mxu0 0.0
    %1374 = vmatprep.subr.mxu0 0.0
    %1375 = vmatpush1.msra.mxu0 0.0
    %1376 = vmatprep.subr.mxu0 0.0
    %1377 = vmatpush1.msra.mxu0 0.0
    %1378 = vmatprep.subr.mxu0 0.0
    %1379 = vmatpush1.msra.mxu0 0.0
    %1380 = vmatprep.subr.mxu0 0.0
    %1381 = vmatpush1.msra.mxu0 0.0
    %1382 = vmatprep.subr.mxu0 0.0
    %1383 = vmatpush1.msra.mxu0 0.0
    %1384 = vmatprep.subr.mxu0 0.0
    %1385 = vmatpush1.msra.mxu0 0.0
    %1386 = vmatprep.subr.mxu0 0.0
    %1387 = vmatpush1.msra.mxu0 0.0
    %1388 = vmatprep.subr.mxu0 0.0
    %1389 = vmatpush1.msra.mxu0 0.0
    %1390 = vmatprep.subr.mxu0 0.0
    %1391 = vmatpush1.msra.mxu0 0.0
    %1392 = vmatprep.mubr.f32.mxu0 0.0
    %1393 = vmatmul.mubr.f32.gmra.mrb[0].mxu0 %v1327
    %v1394 = vpop.f32.mrb[0].mxu0
    %v1395 = vadd.f32 0.0, %v1394
    %v1396 = vpop.f32.mrb[0].mxu0
    %1397 = vdwg.mxu0
    %v1398 = vadd.f32 %v1247, %v1318
    %v1399 = vxor.u32 %v1398, 2147483648
    %v1400 = vmul.f32 %v1399, 1.442695
    %v1401 = vpow.pop %v1400
    %v1402 = vadd.f32 %v1401, 1.0
    %v1403 = vrcp.pop %v1402
    %v1404 = vmul.f32 1.0, %v1403
    %v1405 = vadd.f32 %v1248, %v1395
    %v1406 = vtanh.pop %v1405
    %v1407 = vsub.f32 %v1406, %v1244
    %v1408 = vmul.f32 %v1404, %v1407
    %v1409 = vadd.f32 %v1244, %v1408
    %v1410 = vadd.f32 %v1245, %v1409
    %v1411 = vld [vmem:[#allocation2 + $0x90] sm:$0xff]
    %v1412 = vld [vmem:[#allocation2 + $0x98] sm:$0xff]
    %v1413 = vld [vmem:[#allocation2 + $0xa0] sm:$0xff]
    %1414 = vmatprep.subr.mxu0 %v374
    %1415 = vmatpush1.msra.mxu0 %v373
    %1416 = vmatprep.subr.mxu0 %v376
    %1417 = vmatpush1.msra.mxu0 %v375
    %1418 = vmatprep.subr.mxu0 %v378
    %1419 = vmatpush1.msra.mxu0 %v377
    %1420 = vmatprep.subr.mxu0 %v380
    %1421 = vmatpush1.msra.mxu0 %v379
    %1422 = vmatprep.subr.mxu0 %v382
    %1423 = vmatpush1.msra.mxu0 %v381
    %1424 = vmatprep.subr.mxu0 %v384
    %1425 = vmatpush1.msra.mxu0 %v383
    %1426 = vmatprep.subr.mxu0 %v386
    %1427 = vmatpush1.msra.mxu0 %v385
    %1428 = vmatprep.subr.mxu0 %v388
    %1429 = vmatpush1.msra.mxu0 %v387
    %1430 = vmatprep.subr.mxu0 %v390
    %1431 = vmatpush1.msra.mxu0 %v389
    %1432 = vmatprep.subr.mxu0 %v392
    %1433 = vmatpush1.msra.mxu0 %v391
    %1434 = vmatprep.subr.mxu0 %v394
    %1435 = vmatpush1.msra.mxu0 %v393
    %1436 = vmatprep.subr.mxu0 %v396
    %1437 = vmatpush1.msra.mxu0 %v395
    %1438 = vmatprep.subr.mxu0 %v398
    %1439 = vmatpush1.msra.mxu0 %v397
    %1440 = vmatprep.subr.mxu0 %v400
    %1441 = vmatpush1.msra.mxu0 %v399
    %1442 = vmatprep.subr.mxu0 %v402
    %1443 = vmatpush1.msra.mxu0 %v401
    %1444 = vmatprep.subr.mxu0 %v404
    %1445 = vmatpush1.msra.mxu0 %v403
    %1446 = vmatprep.subr.mxu0 0.0
    %1447 = vmatpush1.msra.mxu0 0.0
    %1448 = vmatprep.subr.mxu0 0.0
    %1449 = vmatpush1.msra.mxu0 0.0
    %1450 = vmatprep.subr.mxu0 0.0
    %1451 = vmatpush1.msra.mxu0 0.0
    %1452 = vmatprep.subr.mxu0 0.0
    %1453 = vmatpush1.msra.mxu0 0.0
    %1454 = vmatprep.subr.mxu0 0.0
    %1455 = vmatpush1.msra.mxu0 0.0
    %1456 = vmatprep.subr.mxu0 0.0
    %1457 = vmatpush1.msra.mxu0 0.0
    %1458 = vmatprep.subr.mxu0 0.0
    %1459 = vmatpush1.msra.mxu0 0.0
    %1460 = vmatprep.subr.mxu0 0.0
    %1461 = vmatpush1.msra.mxu0 0.0
    %1462 = vmatprep.subr.mxu0 0.0
    %1463 = vmatpush1.msra.mxu0 0.0
    %1464 = vmatprep.subr.mxu0 0.0
    %1465 = vmatpush1.msra.mxu0 0.0
    %1466 = vmatprep.subr.mxu0 0.0
    %1467 = vmatpush1.msra.mxu0 0.0
    %1468 = vmatprep.subr.mxu0 0.0
    %1469 = vmatpush1.msra.mxu0 0.0
    %1470 = vmatprep.subr.mxu0 0.0
    %1471 = vmatpush1.msra.mxu0 0.0
    %1472 = vmatprep.subr.mxu0 0.0
    %1473 = vmatpush1.msra.mxu0 0.0
    %1474 = vmatprep.subr.mxu0 0.0
    %1475 = vmatpush1.msra.mxu0 0.0
    %1476 = vmatprep.subr.mxu0 0.0
    %1477 = vmatpush1.msra.mxu0 0.0
    %1478 = vmatprep.mubr.f32.mxu0 0.0
    %1479 = vmatmul.mubr.f32.gmra.mrb[0].mxu0 %v1409
    %v1480 = vpop.f32.mrb[0].mxu0
    %v1481 = vadd.f32 0.0, %v1480
    %v1482 = vpop.f32.mrb[0].mxu0
    %v1483 = vadd.f32 0.0, %v1482
    %1484 = vdwg.mxu0
    %v1485 = vadd.f32 %v1411, %v1481
    %v1486 = vxor.u32 %v1485, 2147483648
    %v1487 = vmul.f32 %v1486, 1.442695
    %v1488 = vpow.pop %v1487
    %v1489 = vadd.f32 %v1488, 1.0
    %v1490 = vrcp.pop %v1489
    %v1491 = vmul.f32 1.0, %v1490
    %v1492 = vmul.f32 %v1491, %v1409
    %1493 = vmatprep.subr.mxu0 0.0
    %1494 = vmatpush1.msra.mxu0 %v405
    %1495 = vmatprep.subr.mxu0 0.0
    %1496 = vmatpush1.msra.mxu0 %v406
    %1497 = vmatprep.subr.mxu0 0.0
    %1498 = vmatpush1.msra.mxu0 %v407
    %1499 = vmatprep.subr.mxu0 0.0
    %1500 = vmatpush1.msra.mxu0 %v408
    %1501 = vmatprep.subr.mxu0 0.0
    %1502 = vmatpush1.msra.mxu0 %v409
    %1503 = vmatprep.subr.mxu0 0.0
    %1504 = vmatpush1.msra.mxu0 %v410
    %1505 = vmatprep.subr.mxu0 0.0
    %1506 = vmatpush1.msra.mxu0 %v411
    %1507 = vmatprep.subr.mxu0 0.0
    %1508 = vmatpush1.msra.mxu0 %v412
    %1509 = vmatprep.subr.mxu0 0.0
    %1510 = vmatpush1.msra.mxu0 %v413
    %1511 = vmatprep.subr.mxu0 0.0
    %1512 = vmatpush1.msra.mxu0 %v414
    %1513 = vmatprep.subr.mxu0 0.0
    %1514 = vmatpush1.msra.mxu0 %v415
    %1515 = vmatprep.subr.mxu0 0.0
    %1516 = vmatpush1.msra.mxu0 %v416
    %1517 = vmatprep.subr.mxu0 0.0
    %1518 = vmatpush1.msra.mxu0 %v417
    %1519 = vmatprep.subr.mxu0 0.0
    %1520 = vmatpush1.msra.mxu0 %v418
    %1521 = vmatprep.subr.mxu0 0.0
    %1522 = vmatpush1.msra.mxu0 %v419
    %1523 = vmatprep.subr.mxu0 0.0
    %1524 = vmatpush1.msra.mxu0 %v420
    %1525 = vmatprep.subr.mxu0 0.0
    %1526 = vmatpush1.msra.mxu0 0.0
    %1527 = vmatprep.subr.mxu0 0.0
    %1528 = vmatpush1.msra.mxu0 0.0
    %1529 = vmatprep.subr.mxu0 0.0
    %1530 = vmatpush1.msra.mxu0 0.0
    %1531 = vmatprep.subr.mxu0 0.0
    %1532 = vmatpush1.msra.mxu0 0.0
    %1533 = vmatprep.subr.mxu0 0.0
    %1534 = vmatpush1.msra.mxu0 0.0
    %1535 = vmatprep.subr.mxu0 0.0
    %1536 = vmatpush1.msra.mxu0 0.0
    %1537 = vmatprep.subr.mxu0 0.0
    %1538 = vmatpush1.msra.mxu0 0.0
    %1539 = vmatprep.subr.mxu0 0.0
    %1540 = vmatpush1.msra.mxu0 0.0
    %1541 = vmatprep.subr.mxu0 0.0
    %1542 = vmatpush1.msra.mxu0 0.0
    %1543 = vmatprep.subr.mxu0 0.0
    %1544 = vmatpush1.msra.mxu0 0.0
    %1545 = vmatprep.subr.mxu0 0.0
    %1546 = vmatpush1.msra.mxu0 0.0
    %1547 = vmatprep.subr.mxu0 0.0
    %1548 = vmatpush1.msra.mxu0 0.0
    %1549 = vmatprep.subr.mxu0 0.0
    %1550 = vmatpush1.msra.mxu0 0.0
    %1551 = vmatprep.subr.mxu0 0.0
    %1552 = vmatpush1.msra.mxu0 0.0
    %1553 = vmatprep.subr.mxu0 0.0
    %1554 = vmatpush1.msra.mxu0 0.0
    %1555 = vmatprep.subr.mxu0 0.0
    %1556 = vmatpush1.msra.mxu0 0.0
    %1557 = vmatprep.mubr.f32.mxu0 0.0
    %1558 = vmatmul.mubr.f32.gmra.mrb[0].mxu0 %v1492
    %v1559 = vpop.f32.mrb[0].mxu0
    %v1560 = vadd.f32 0.0, %v1559
    %v1561 = vpop.f32.mrb[0].mxu0
    %1562 = vdwg.mxu0
    %v1563 = vadd.f32 %v1412, %v1483
    %v1564 = vxor.u32 %v1563, 2147483648
    %v1565 = vmul.f32 %v1564, 1.442695
    %v1566 = vpow.pop %v1565
    %v1567 = vadd.f32 %v1566, 1.0
    %v1568 = vrcp.pop %v1567
    %v1569 = vmul.f32 1.0, %v1568
    %v1570 = vadd.f32 %v1413, %v1560
    %v1571 = vtanh.pop %v1570
    %v1572 = vsub.f32 %v1571, %v1409
    %v1573 = vmul.f32 %v1569, %v1572
    %v1574 = vadd.f32 %v1409, %v1573
    %v1575 = vadd.f32 %v1410, %v1574
    %v1578 = vunpack.c.l.s4 1983009808
    %v1579 = vunpack.c.0.s8 %v1578
    %v1580 = vlaneseq
    %v1581 = vshrl.u32 %v1580, 7
    %v1582 = vsub.s32 %v1579, %v1581
    %v1583 = vrot.slane %v1575, %v1582
    %v1584 = vcombine.high %v1583, %v1583
    %vm1587 = vcmask 1041408
    %v1588 = vsel %vm1587, %v1583, 0.0
    %v1589 = vrot.slane %v1588, 4
    %v1590 = vadd.f32 %v1588, %v1589
    %v1591 = vrot.slane %v1590, 2
    %v1592 = vadd.f32 %v1590, %v1591
    %v1593 = vrot.slane %v1592, 1
    %v1594 = vadd.f32 %v1592, %v1593
    %v1595 = vsel %vm1587, %v1584, 0.0
    %v1596 = vrot.slane %v1595, 4
    %v1597 = vadd.f32 %v1595, %v1596
    %v1598 = vrot.slane %v1597, 2
    %v1599 = vadd.f32 %v1597, %v1598
    %v1600 = vrot.slane %v1599, 1
    %v1601 = vadd.f32 %v1599, %v1600
    %v1604 = vunpack.c.l.s4 1983009808
    %v1605 = vunpack.c.0.s8 %v1604
    %v1606 = vlaneseq
    %v1607 = vshrl.u32 %v1606, 7
    %v1608 = vsub.s32 %v1605, %v1607
    %v1609 = vrot.slane %v313, %v1608
    %v1610 = vcombine.high %v1609, %v1609
    %v1613 = vadd.f32 %v1609, %v1594
    %v1614 = vadd.f32 %v1610, %v1601
    %v1615 = vmul.f32 %v1613, 0.06666667
    %v1616 = vmul.f32 %v1614, 0.06666667
    %v1619 = vlaneseq
    %v1620 = vshrl.u32 %v1619, 7
    %v1621 = vsub.s32 0, %v1620
    %v1622 = vrot.slane %v1615, %v1621
    %v1623 = vlaneseq
    %v1624 = vshrl.u32 %v1623, 7
    %v1625 = vsub.s32 0, %v1624
    %v1626 = vrot.slane %v1616, %v1625
    %vm1627 = vcmask 1041409
    %v1628 = vsel %vm1627, %v1626, %v1622
    %1630 = vst [vmem:[#allocation3] sm:$0x3] %v1628
    // Predicated region
    $region26: #{fixed_gru_pallas.1} parent=1 // pred_check
      _
    $region27: #{fixed_gru_pallas.1} parent=1 // pred_check_branch
      %1632 = sbr.rel (0) target = $region29
    $region28: #{fixed_gru_pallas.1} parent=1 // pred_region
      %s1634 = ssub.s32 32, 32
      %1635 = vsyncadd [#allocation4], %s1634
      %s1637 = sshll.u32 [#allocation3], 4
      %s1638 = int_to_ptr.vmem [resolvable:$true] %s1637
      %1640 = dma.vmem_to_hbm [thread:$0]  %s1638, 32, %s6, [#allocation4]
    $region29: #{fixed_gru_pallas.1} parent=1 // pred_fallthru
      _
    // Predicated region
    $region30: #{fixed_gru_pallas.1} parent=1 // pred_check
      _
    $region31: #{fixed_gru_pallas.1} parent=1 // pred_check_branch
      %1642 = sbr.rel (0) target = $region33
    $region32: #{fixed_gru_pallas.1} parent=1 // pred_region
      %1643 = dma.done [#allocation4], 32
    $region33: #{fixed_gru_pallas.1} parent=1 // pred_fallthru
      _
    %1644 = vsyncpa [#allocation4], 1

</llo_original>
